<compile_context>
chip_gen: v7x
topology: tpu7x:2x2x1
jax: 0.10.0
libtpu: 0.0.40
codegen_flags: <defaults>
</compile_context>

<pallas_src>
import functools

import jax
import jax.numpy as jnp
from jax.experimental import pallas as pl
from jax.experimental.pallas import tpu as pltpu

FILTERBANK_LEN = 23
BN_EPS = 1e-5


# ---------------------------------------------------------------------------
# Fused Pallas kernel
# ---------------------------------------------------------------------------

def _make_fused_kernel(B, T, T0, PAD, channels, kernels, dilations, num_classes,
                       con_dim, offsets, matmul_dtype, approx_recip):
    """Builds the single fused kernel for a static network configuration."""
    n_sep = len(channels) - 1
    k0, d0 = kernels[0], dilations[0]

    def mm(a, w):
        # Weights are pre-cast in prepare_params(); only the activation is cast here
        # (a no-op in the f32 path). MXU matmul, f32 accumulation.
        return jnp.dot(a.astype(matmul_dtype), w, preferred_element_type=jnp.float32)

    def bn_relu(z):
        # BatchNorm1d(affine=False), training-mode batch stats over all B*T0 rows.
        # One-pass statistics: var = E[z^2] - mean^2 (biased), eps = 1e-5.
        s1 = jnp.mean(z, axis=0, keepdims=True)
        s2 = jnp.mean(z * z, axis=0, keepdims=True)
        inv = jax.lax.rsqrt(jnp.maximum(s2 - s1 * s1, 0.0) + BN_EPS)
        return jnp.maximum((z - s1) * inv, 0.0)

    def kernel(x_ref, w_ref, b_ref, probs_ref, con_ref, hp_ref):
        # ---- layer0: in-kernel im2col (valid conv, K = k0*23) + bn0 + relu.
        # Conv bias omitted: exactly cancelled by the affine-free batch-stat BN.
        cols0 = [x_ref[:, j * d0:j * d0 + T0, :] for j in range(k0)]
        xc0 = jnp.concatenate(cols0, axis=-1).reshape(B * T0, k0 * FILTERBANK_LEN)
        c0 = channels[0]
        w0 = w_ref[offsets["w0"]:offsets["w0"] + k0 * FILTERBANK_LEN, :c0]
        h = bn_relu(mm(xc0, w0))                                   # (B*T0, C0) f32

        # Zero only the PAD rows of the causal-pad scratch once; they stay zero for
        # every SepConv layer (reads never touch channels >= current cin).
        hp_ref[:, :PAD, :] = jnp.zeros((B, PAD, hp_ref.shape[-1]), jnp.float32)

        # ---- SepConv1d stack: depthwise fused into pointwise (W_j = diag(wdw_j) @ Wpw,
        # built in prepare_params) -> ONE im2col MXU matmul per layer (K = k*cin).
        for i in range(n_sep):
            k, d = kernels[i + 1], dilations[i + 1]
            cin, cout = channels[i], channels[i + 1]
            h3 = h.reshape(B, T0, cin)
            hp_ref[:, PAD:PAD + T0, :cin] = h3                     # stage once per layer
            cols = []
            for j in range(k):
                s = (k - 1 - j) * d                                # causal shift of tap j
                cols.append(hp_ref[:, PAD - s:PAD - s + T0, :cin])  # rows < PAD are zeros
            xcol = jnp.concatenate(cols, axis=-1).reshape(B * T0, k * cin)
            off = offsets[f"wsep{i + 1}"]
            wsep = w_ref[off:off + k * cin, :cout]
            # Pointwise bias omitted (cancelled by the BN that follows).
            h = bn_relu(mm(xcol, wsep))                            # (B*T0, cout)

        c_last = channels[-1]
        h3 = h.reshape(B, T0, c_last)

        # ---- StatisticsPooling (mean + unbiased std over time) fused with con_dense:
        # con_dense(concat(mean, std)) == mean @ Wcm + std @ Wcs + b_con
        # (W_con split in prepare_params -> no lane-dim concat needed in-kernel).
        mean_t = jnp.mean(h3, axis=1)                              # (B, C)
        cen = h3 - mean_t[:, None, :]
        std_t = jnp.sqrt(jnp.sum(cen * cen, axis=1) * (1.0 / (T0 - 1)))
        wcm = w_ref[offsets["wcm"]:offsets["wcm"] + c_last, :con_dim]
        wcs = w_ref[offsets["wcs"]:offsets["wcs"] + c_last, :con_dim]
        con = mm(mean_t, wcm) + mm(std_t, wcs) + b_ref[1:2, :con_dim]
        con_ref[...] = con.reshape(B, 1, con_dim)

        # ---- dense + softmax per timestep (EUP exp; approx reciprocal optional).
        wd = w_ref[offsets["wdense"]:offsets["wdense"] + c_last, :num_classes]
        logits = mm(h, wd) + b_ref[0:1, :num_classes]              # (B*T0, NC)
        m = jnp.max(logits, axis=-1, keepdims=True)
        e = jnp.exp(logits - m)
        den = jnp.sum(e, axis=-1, keepdims=True)
        if approx_recip:
            p = e * pl.reciprocal(den, approx=True)
        else:
            p = e / den
        probs_ref[...] = p.reshape(B, T0, num_classes)

    return kernel


# ---------------------------------------------------------------------------
# One-time parameter preparation (outside the per-call jit path)
# ---------------------------------------------------------------------------

def _pack_weights(mats, matmul_dtype):
    """Pack named 2-D f32 matrices into one row-stacked buffer.

    Each block's row count is padded to a multiple of 16 so in-kernel static row
    slices start at sublane-aligned offsets for both f32 and bf16 buffers.
    Returns (packed_buffer, {name: row_offset}).
    """
    width = max(m.shape[1] for _, m in mats)
    blocks, offsets, off = [], {}, 0
    for name, m in mats:
        r, c = m.shape
        rpad = -(-r // 16) * 16
        blk = jnp.zeros((rpad, width), jnp.float32).at[:r, :c].set(m)
        blocks.append(blk)
        offsets[name] = off
        off += rpad
    return jnp.concatenate(blocks, axis=0).astype(matmul_dtype), offsets


def prepare_params(params, channels, kernels, dilations, num_classes, con_dim,
                   matmul_dtype=jnp.float32):
    """Reshape / fuse / split / pack / (optionally) cast all weights ONCE.

    Conv biases (b0, bpw_i) are intentionally not packed: with batch_norm=True,
    affine=False, training-mode batch stats (this module's defaults) the BN mean
    subtraction cancels them exactly.
    """
    assert channels[-1] == channels[-2], \
        "con_dense is sized 2*channels[-2]; pooling the last layer needs channels[-1]==channels[-2]"
    k0 = kernels[0]
    c_last = channels[-1]

    mats = [("w0", params["w0"].reshape(k0 * FILTERBANK_LEN, channels[0]))]
    for i in range(1, len(channels)):
        cin, cout = channels[i - 1], channels[i]
        k = kernels[i]
        # Fuse depthwise into pointwise in f32, cast afterwards (bf16 path):
        # W_j[c, o] = wdw[j, c] * Wpw[c, o], stacked over taps j -> (k*cin, cout).
        wsep = (params[f"wdw{i}"][:, :, None] * params[f"wpw{i}"][None, :, :]
                ).reshape(k * cin, cout)
        mats.append((f"wsep{i}", wsep))
    mats += [("wcm", params["w_con"][:c_last]),       # mean half of con_dense
             ("wcs", params["w_con"][c_last:]),       # std half of con_dense
             ("wdense", params["w_dense"])]
    wbuf, offsets = _pack_weights(mats, matmul_dtype)

    bwidth = max(num_classes, con_dim)
    bbuf = jnp.zeros((2, bwidth), jnp.float32)
    bbuf = bbuf.at[0, :num_classes].set(params["b_dense"].reshape(-1))
    bbuf = bbuf.at[1, :con_dim].set(params["b_con"].reshape(-1))
    return wbuf, bbuf, offsets


# ---------------------------------------------------------------------------
# Wrapper: one gridless pallas_call for the whole forward pass
# ---------------------------------------------------------------------------

def tcn_sep_forward(wbuf, bbuf, x, *, offsets, channels, kernels, dilations,
                    num_classes, con_dim, matmul_dtype=jnp.float32,
                    approx_recip=True):
    B, T, cin0 = x.shape
    assert cin0 == FILTERBANK_LEN
    assert channels[-1] == channels[-2]
    k0, d0 = kernels[0], dilations[0]
    T0 = T - (k0 - 1) * d0
    assert T0 >= 2, "unbiased std over time needs at least 2 output frames"

    # Causal-pad scratch sizing: max pad over SepConv layers, rounded to 8 sublanes.
    pad_max = max((kernels[i] - 1) * dilations[i] for i in range(1, len(channels)))
    PAD = max(8, -(-pad_max // 8) * 8)
    c_max = max(channels)

    kernel = _make_fused_kernel(B, T, T0, PAD, tuple(channels), tuple(kernels),
                                tuple(dilations), num_classes, con_dim,
                                dict(offsets), matmul_dtype, approx_recip)

    probs, con_x = pl.pallas_call(
        kernel,
        out_shape=(jax.ShapeDtypeStruct((B, T0, num_classes), jnp.float32),
                   jax.ShapeDtypeStruct((B, 1, con_dim), jnp.float32)),
        in_specs=[pl.BlockSpec(memory_space=pltpu.MemorySpace.VMEM)] * 3,
        out_specs=(pl.BlockSpec(memory_space=pltpu.MemorySpace.VMEM),
                   pl.BlockSpec(memory_space=pltpu.MemorySpace.VMEM)),
        scratch_shapes=[pltpu.VMEM((B, PAD + T0, c_max), jnp.float32)],
        # Tens of KiB of VMEM today; keep the request <= 32 MiB so it also fits v7x
        # headroom (64 MiB physical) untouched.
        compiler_params=pltpu.CompilerParams(vmem_limit_bytes=32 * 1024 * 1024),
    )(x, wbuf, bbuf)
    return probs, con_x


# ---------------------------------------------------------------------------
# Pure-JAX reference (exact module semantics, including the conv biases the
# kernel provably drops) — correctness gate.
# ---------------------------------------------------------------------------

def tcn_sep_reference(params, x, channels, kernels, dilations, num_classes, con_dim):
    hi = "highest"
    B, T, _ = x.shape
    k0, d0 = kernels[0], dilations[0]
    T0 = T - (k0 - 1) * d0

    def bn_relu(z):
        mean = jnp.mean(z, axis=(0, 1), keepdims=True)
        var = jnp.mean(jnp.square(z - mean), axis=(0, 1), keepdims=True)
        return jnp.maximum((z - mean) / jnp.sqrt(var + BN_EPS), 0.0)

    acc = jnp.zeros((B, T0, channels[0]), jnp.float32)
    for j in range(k0):
        acc = acc + jnp.einsum("btc,cd->btd", x[:, j * d0:j * d0 + T0, :],
                               params["w0"][j], precision=hi)
    h = bn_relu(acc + params["b0"][None])

    for i in range(1, len(channels)):
        k, d = kernels[i], dilations[i]
        pad = (k - 1) * d
        hp = jnp.pad(h, ((0, 0), (pad, 0), (0, 0)))
        dw = jnp.zeros_like(h)
        for j in range(k):
            dw = dw + hp[:, j * d:j * d + T0, :] * params[f"wdw{i}"][j][None, None, :]
        pw = jnp.einsum("btc,cd->btd", dw, params[f"wpw{i}"], precision=hi) \
            + params[f"bpw{i}"][None]
        h = bn_relu(pw)

    mean_t = jnp.mean(h, axis=1)
    std_t = jnp.sqrt(jnp.sum(jnp.square(h - mean_t[:, None, :]), axis=1) / (T0 - 1))
    stats = jnp.concatenate([mean_t, std_t], axis=-1)
    con = jnp.dot(stats, params["w_con"], precision=hi) + params["b_con"]
    logits = jnp.einsum("btc,cd->btd", h, params["w_dense"], precision=hi) \
        + params["b_dense"][None]
    probs = jax.nn.softmax(logits, axis=-1)
    return probs, con[:, None, :]


# ---------------------------------------------------------------------------
# Parameter init (deterministic; shapes follow the PyTorch module __init__,
# stored channels-last / tap-major so no per-call transposes are needed)
# ---------------------------------------------------------------------------

def init_params(key, channels, kernels, dilations, num_classes, con_dim):
    n_layers = len(channels)
    n_keys = 2 + 3 * (n_layers - 1) + 4
    keys = iter(jax.random.split(key, n_keys))
    s = 0.1
    params = {
        # Conv1d(23, C0, k0): torch (C0, 23, k0) stored as (k0, 23, C0)
        "w0": s * jax.random.normal(next(keys), (kernels[0], FILTERBANK_LEN, channels[0]),
                                    jnp.float32),
        "b0": s * jax.random.normal(next(keys), (1, channels[0]), jnp.float32),
    }
    for i in range(1, n_layers):
        cin, cout = channels[i - 1], channels[i]
        # depthwise torch (cin, 1, k) stored as (k, cin)
        params[f"wdw{i}"] = s * jax.random.normal(next(keys), (kernels[i], cin), jnp.float32)
        # pointwise torch (cout, cin, 1) stored as (cin, cout)
        params[f"wpw{i}"] = s * jax.random.normal(next(keys), (cin, cout), jnp.float32)
        params[f"bpw{i}"] = s * jax.random.normal(next(keys), (1, cout), jnp.float32)
    params["w_dense"] = s * jax.random.normal(next(keys), (channels[-1], num_classes),
                                              jnp.float32)
    params["b_dense"] = s * jax.random.normal(next(keys), (1, num_classes), jnp.float32)
    params["w_con"] = s * jax.random.normal(next(keys), (2 * channels[-2], con_dim),
                                            jnp.float32)
    params["b_con"] = s * jax.random.normal(next(keys), (1, con_dim), jnp.float32)
    return params


# ---------------------------------------------------------------------------

if __name__ == "__main__":
    # small synthetic config (channels[-1] == channels[-2], as the module requires)
    channels = (32, 32, 32)
    kernels = (3, 3, 3)
    dilations = (1, 2, 4)
    num_classes = 4
    con_dim = 16
    # T chosen so T0 = 32 is a multiple of 8 -> in-kernel reshapes are layout no-ops.
    B, T = 2, 34

    key = jax.random.PRNGKey(0)
    kx, kp = jax.random.split(key)
    x = jax.random.normal(kx, (B, T, FILTERBANK_LEN), jnp.float32)
    params = init_params(kp, channels, kernels, dilations, num_classes, con_dim)

    cfg = dict(channels=channels, kernels=kernels, dilations=dilations,
               num_classes=num_classes, con_dim=con_dim)

    # One-time parameter prep (reshape / depthwise-pointwise fusion / packing) done
    # outside the per-call jit path.
    wbuf, bbuf, offsets = prepare_params(params, **cfg)

    # f32 fused kernel (single gridless pallas_call, 3 operands)
    fwd = jax.jit(functools.partial(tcn_sep_forward, offsets=offsets,
                                    matmul_dtype=jnp.float32, **cfg))
    probs, con_x = fwd(wbuf, bbuf, x)
    jax.block_until_ready((probs, con_x))

    T0 = T - (kernels[0] - 1) * dilations[0]
    assert probs.shape == (B, T0, num_classes)
    assert con_x.shape == (B, 1, con_dim)

    # correctness gate vs. pure-JAX reference
    ref_probs, ref_con = jax.jit(functools.partial(tcn_sep_reference, **cfg))(params, x)
    assert bool(jnp.allclose(probs, ref_probs, rtol=2e-2, atol=2e-2))
    assert bool(jnp.allclose(con_x, ref_con, rtol=2e-2, atol=2e-2))
    # softmax self-consistency: approx reciprocal keeps row sums within ~3e-4 of 1
    assert bool(jnp.allclose(jnp.sum(probs, axis=-1), 1.0, atol=5e-3))

    # bf16-MXU-operand variant (v6e/v7x): weights pre-cast once, checked vs reference.
    wbuf16, bbuf16, off16 = prepare_params(params, matmul_dtype=jnp.bfloat16, **cfg)
    fwd_bf16 = jax.jit(functools.partial(tcn_sep_forward, offsets=off16,
                                         matmul_dtype=jnp.bfloat16, **cfg))
    probs_bf, con_bf = fwd_bf16(wbuf16, bbuf16, x)
    jax.block_until_ready((probs_bf, con_bf))
    assert probs_bf.shape == probs.shape and con_bf.shape == con_x.shape
    assert bool(jnp.allclose(probs_bf, ref_probs, rtol=3e-2, atol=3e-2))
    assert bool(jnp.allclose(con_bf, ref_con, rtol=3e-2, atol=3e-2))

    print("KERNEL_OK")
</pallas_src>

<mosaic_0001>
module attributes {stable_mosaic.version = 11 : i64} {
  func.func @kernel(%arg0: memref<2x34x23xf32, #tpu.memory_space<vmem>>, %arg1: memref<368x32xf32, #tpu.memory_space<vmem>>, %arg2: memref<2x16xf32, #tpu.memory_space<vmem>>, %arg3: memref<2x32x4xf32, #tpu.memory_space<vmem>>, %arg4: memref<2x1x16xf32, #tpu.memory_space<vmem>>, %arg5: memref<2x40x32xf32, #tpu.memory_space<vmem>>) attributes {dimension_semantics = [], scalar_prefetch = 0 : i64, scratch_operands = 1 : i64, tpu.core_type = #tpu.core_type<tc>} {
    %c0 = arith.constant 0 : index
    %c0_0 = arith.constant 0 : index
    %c0_1 = arith.constant 0 : index
    %0 = vector.load %arg0[%c0, %c0_0, %c0_1] : memref<2x34x23xf32, #tpu.memory_space<vmem>>, vector<2x32x23xf32>
    %c0_2 = arith.constant 0 : index
    %c1 = arith.constant 1 : index
    %c0_3 = arith.constant 0 : index
    %1 = vector.load %arg0[%c0_2, %c1, %c0_3] : memref<2x34x23xf32, #tpu.memory_space<vmem>>, vector<2x32x23xf32>
    %c0_4 = arith.constant 0 : index
    %c2 = arith.constant 2 : index
    %c0_5 = arith.constant 0 : index
    %2 = vector.load %arg0[%c0_4, %c2, %c0_5] : memref<2x34x23xf32, #tpu.memory_space<vmem>>, vector<2x32x23xf32>
    %3 = tpu.concatenate %0, %1, %2 in 2 : vector<2x32x23xf32>, vector<2x32x23xf32>, vector<2x32x23xf32> -> vector<2x32x69xf32>
    %4 = vector.shape_cast %3 : vector<2x32x69xf32> to vector<64x69xf32>
    %c0_6 = arith.constant 0 : index
    %c0_7 = arith.constant 0 : index
    %5 = vector.load %arg1[%c0_6, %c0_7] : memref<368x32xf32, #tpu.memory_space<vmem>>, vector<69x32xf32>
    %cst = arith.constant dense<0.000000e+00> : vector<64x32xf32>
    %6 = tpu.matmul %4, %5, %cst {dimension_numbers = #tpu.dot_dimension_numbers<[1], [0], [0], [1], [0, 0, 1, 1], [], []>} : vector<64x69xf32>, vector<69x32xf32>, vector<64x32xf32> -> vector<64x32xf32>
    %cst_8 = arith.constant dense<0.000000e+00> : vector<32xf32>
    %7 = vector.multi_reduction <add>, %6, %cst_8 [0] : vector<64x32xf32> to vector<32xf32>
    %8 = vector.shape_cast %7 : vector<32xf32> to vector<1x32xf32>
    %cst_9 = arith.constant 6.400000e+01 : f32
    %9 = vector.broadcast %cst_9 : f32 to vector<1x32xf32>
    %10 = arith.divf %8, %9 : vector<1x32xf32>
    %11 = arith.mulf %6, %6 : vector<64x32xf32>
    %cst_10 = arith.constant dense<0.000000e+00> : vector<32xf32>
    %12 = vector.multi_reduction <add>, %11, %cst_10 [0] : vector<64x32xf32> to vector<32xf32>
    %13 = vector.shape_cast %12 : vector<32xf32> to vector<1x32xf32>
    %cst_11 = arith.constant 6.400000e+01 : f32
    %14 = vector.broadcast %cst_11 : f32 to vector<1x32xf32>
    %15 = arith.divf %13, %14 : vector<1x32xf32>
    %16 = arith.mulf %10, %10 : vector<1x32xf32>
    %17 = arith.subf %15, %16 : vector<1x32xf32>
    %cst_12 = arith.constant 0.000000e+00 : f32
    %18 = vector.broadcast %cst_12 : f32 to vector<1x32xf32>
    %19 = arith.maximumf %17, %18 : vector<1x32xf32>
    %cst_13 = arith.constant 9.99999974E-6 : f32
    %20 = vector.broadcast %cst_13 : f32 to vector<1x32xf32>
    %21 = arith.addf %19, %20 : vector<1x32xf32>
    %22 = math.rsqrt %21 : vector<1x32xf32>
    %23 = vector.broadcast %10 : vector<1x32xf32> to vector<64x32xf32>
    %24 = arith.subf %6, %23 : vector<64x32xf32>
    %25 = vector.broadcast %22 : vector<1x32xf32> to vector<64x32xf32>
    %26 = arith.mulf %24, %25 : vector<64x32xf32>
    %cst_14 = arith.constant 0.000000e+00 : f32
    %27 = vector.broadcast %cst_14 : f32 to vector<64x32xf32>
    %28 = arith.maximumf %26, %27 : vector<64x32xf32>
    %cst_15 = arith.constant 0.000000e+00 : f32
    %29 = vector.broadcast %cst_15 : f32 to vector<2x8x32xf32>
    %c0_16 = arith.constant 0 : index
    %c0_17 = arith.constant 0 : index
    %c0_18 = arith.constant 0 : index
    %30 = vector.load %arg5[%c0_16, %c0_17, %c0_18] : memref<2x40x32xf32, #tpu.memory_space<vmem>>, vector<2x8x32xf32>
    tpu.vector_store %arg5[%c0_16, %c0_17, %c0_18], %29 {strides = array<i32>} : memref<2x40x32xf32, #tpu.memory_space<vmem>>, vector<2x8x32xf32>,
    %31 = vector.shape_cast %28 : vector<64x32xf32> to vector<2x32x32xf32>
    %c0_19 = arith.constant 0 : index
    %c8 = arith.constant 8 : index
    %c0_20 = arith.constant 0 : index
    %32 = vector.load %arg5[%c0_19, %c8, %c0_20] : memref<2x40x32xf32, #tpu.memory_space<vmem>>, vector<2x32x32xf32>
    tpu.vector_store %arg5[%c0_19, %c8, %c0_20], %31 {strides = array<i32>} : memref<2x40x32xf32, #tpu.memory_space<vmem>>, vector<2x32x32xf32>,
    %c0_21 = arith.constant 0 : index
    %c4 = arith.constant 4 : index
    %c0_22 = arith.constant 0 : index
    %33 = vector.load %arg5[%c0_21, %c4, %c0_22] : memref<2x40x32xf32, #tpu.memory_space<vmem>>, vector<2x32x32xf32>
    %c0_23 = arith.constant 0 : index
    %c6 = arith.constant 6 : index
    %c0_24 = arith.constant 0 : index
    %34 = vector.load %arg5[%c0_23, %c6, %c0_24] : memref<2x40x32xf32, #tpu.memory_space<vmem>>, vector<2x32x32xf32>
    %c0_25 = arith.constant 0 : index
    %c8_26 = arith.constant 8 : index
    %c0_27 = arith.constant 0 : index
    %35 = vector.load %arg5[%c0_25, %c8_26, %c0_27] : memref<2x40x32xf32, #tpu.memory_space<vmem>>, vector<2x32x32xf32>
    %36 = tpu.concatenate %33, %34, %35 in 2 : vector<2x32x32xf32>, vector<2x32x32xf32>, vector<2x32x32xf32> -> vector<2x32x96xf32>
    %37 = vector.shape_cast %36 : vector<2x32x96xf32> to vector<64x96xf32>
    %c80 = arith.constant 80 : index
    %c0_28 = arith.constant 0 : index
    %38 = vector.load %arg1[%c80, %c0_28] : memref<368x32xf32, #tpu.memory_space<vmem>>, vector<96x32xf32>
    %cst_29 = arith.constant dense<0.000000e+00> : vector<64x32xf32>
    %39 = tpu.matmul %37, %38, %cst_29 {dimension_numbers = #tpu.dot_dimension_numbers<[1], [0], [0], [1], [0, 0, 1, 1], [], []>} : vector<64x96xf32>, vector<96x32xf32>, vector<64x32xf32> -> vector<64x32xf32>
    %cst_30 = arith.constant dense<0.000000e+00> : vector<32xf32>
    %40 = vector.multi_reduction <add>, %39, %cst_30 [0] : vector<64x32xf32> to vector<32xf32>
    %41 = vector.shape_cast %40 : vector<32xf32> to vector<1x32xf32>
    %cst_31 = arith.constant 6.400000e+01 : f32
    %42 = vector.broadcast %cst_31 : f32 to vector<1x32xf32>
    %43 = arith.divf %41, %42 : vector<1x32xf32>
    %44 = arith.mulf %39, %39 : vector<64x32xf32>
    %cst_32 = arith.constant dense<0.000000e+00> : vector<32xf32>
    %45 = vector.multi_reduction <add>, %44, %cst_32 [0] : vector<64x32xf32> to vector<32xf32>
    %46 = vector.shape_cast %45 : vector<32xf32> to vector<1x32xf32>
    %cst_33 = arith.constant 6.400000e+01 : f32
    %47 = vector.broadcast %cst_33 : f32 to vector<1x32xf32>
    %48 = arith.divf %46, %47 : vector<1x32xf32>
    %49 = arith.mulf %43, %43 : vector<1x32xf32>
    %50 = arith.subf %48, %49 : vector<1x32xf32>
    %cst_34 = arith.constant 0.000000e+00 : f32
    %51 = vector.broadcast %cst_34 : f32 to vector<1x32xf32>
    %52 = arith.maximumf %50, %51 : vector<1x32xf32>
    %cst_35 = arith.constant 9.99999974E-6 : f32
    %53 = vector.broadcast %cst_35 : f32 to vector<1x32xf32>
    %54 = arith.addf %52, %53 : vector<1x32xf32>
    %55 = math.rsqrt %54 : vector<1x32xf32>
    %56 = vector.broadcast %43 : vector<1x32xf32> to vector<64x32xf32>
    %57 = arith.subf %39, %56 : vector<64x32xf32>
    %58 = vector.broadcast %55 : vector<1x32xf32> to vector<64x32xf32>
    %59 = arith.mulf %57, %58 : vector<64x32xf32>
    %cst_36 = arith.constant 0.000000e+00 : f32
    %60 = vector.broadcast %cst_36 : f32 to vector<64x32xf32>
    %61 = arith.maximumf %59, %60 : vector<64x32xf32>
    %62 = vector.shape_cast %61 : vector<64x32xf32> to vector<2x32x32xf32>
    %c0_37 = arith.constant 0 : index
    %c8_38 = arith.constant 8 : index
    %c0_39 = arith.constant 0 : index
    %63 = vector.load %arg5[%c0_37, %c8_38, %c0_39] : memref<2x40x32xf32, #tpu.memory_space<vmem>>, vector<2x32x32xf32>
    tpu.vector_store %arg5[%c0_37, %c8_38, %c0_39], %62 {strides = array<i32>} : memref<2x40x32xf32, #tpu.memory_space<vmem>>, vector<2x32x32xf32>,
    %c0_40 = arith.constant 0 : index
    %c0_41 = arith.constant 0 : index
    %c0_42 = arith.constant 0 : index
    %64 = vector.load %arg5[%c0_40, %c0_41, %c0_42] : memref<2x40x32xf32, #tpu.memory_space<vmem>>, vector<2x32x32xf32>
    %c0_43 = arith.constant 0 : index
    %c4_44 = arith.constant 4 : index
    %c0_45 = arith.constant 0 : index
    %65 = vector.load %arg5[%c0_43, %c4_44, %c0_45] : memref<2x40x32xf32, #tpu.memory_space<vmem>>, vector<2x32x32xf32>
    %c0_46 = arith.constant 0 : index
    %c8_47 = arith.constant 8 : index
    %c0_48 = arith.constant 0 : index
    %66 = vector.load %arg5[%c0_46, %c8_47, %c0_48] : memref<2x40x32xf32, #tpu.memory_space<vmem>>, vector<2x32x32xf32>
    %67 = tpu.concatenate %64, %65, %66 in 2 : vector<2x32x32xf32>, vector<2x32x32xf32>, vector<2x32x32xf32> -> vector<2x32x96xf32>
    %68 = vector.shape_cast %67 : vector<2x32x96xf32> to vector<64x96xf32>
    %c176 = arith.constant 176 : index
    %c0_49 = arith.constant 0 : index
    %69 = vector.load %arg1[%c176, %c0_49] : memref<368x32xf32, #tpu.memory_space<vmem>>, vector<96x32xf32>
    %cst_50 = arith.constant dense<0.000000e+00> : vector<64x32xf32>
    %70 = tpu.matmul %68, %69, %cst_50 {dimension_numbers = #tpu.dot_dimension_numbers<[1], [0], [0], [1], [0, 0, 1, 1], [], []>} : vector<64x96xf32>, vector<96x32xf32>, vector<64x32xf32> -> vector<64x32xf32>
    %cst_51 = arith.constant dense<0.000000e+00> : vector<32xf32>
    %71 = vector.multi_reduction <add>, %70, %cst_51 [0] : vector<64x32xf32> to vector<32xf32>
    %72 = vector.shape_cast %71 : vector<32xf32> to vector<1x32xf32>
    %cst_52 = arith.constant 6.400000e+01 : f32
    %73 = vector.broadcast %cst_52 : f32 to vector<1x32xf32>
    %74 = arith.divf %72, %73 : vector<1x32xf32>
    %75 = arith.mulf %70, %70 : vector<64x32xf32>
    %cst_53 = arith.constant dense<0.000000e+00> : vector<32xf32>
    %76 = vector.multi_reduction <add>, %75, %cst_53 [0] : vector<64x32xf32> to vector<32xf32>
    %77 = vector.shape_cast %76 : vector<32xf32> to vector<1x32xf32>
    %cst_54 = arith.constant 6.400000e+01 : f32
    %78 = vector.broadcast %cst_54 : f32 to vector<1x32xf32>
    %79 = arith.divf %77, %78 : vector<1x32xf32>
    %80 = arith.mulf %74, %74 : vector<1x32xf32>
    %81 = arith.subf %79, %80 : vector<1x32xf32>
    %cst_55 = arith.constant 0.000000e+00 : f32
    %82 = vector.broadcast %cst_55 : f32 to vector<1x32xf32>
    %83 = arith.maximumf %81, %82 : vector<1x32xf32>
    %cst_56 = arith.constant 9.99999974E-6 : f32
    %84 = vector.broadcast %cst_56 : f32 to vector<1x32xf32>
    %85 = arith.addf %83, %84 : vector<1x32xf32>
    %86 = math.rsqrt %85 : vector<1x32xf32>
    %87 = vector.broadcast %74 : vector<1x32xf32> to vector<64x32xf32>
    %88 = arith.subf %70, %87 : vector<64x32xf32>
    %89 = vector.broadcast %86 : vector<1x32xf32> to vector<64x32xf32>
    %90 = arith.mulf %88, %89 : vector<64x32xf32>
    %cst_57 = arith.constant 0.000000e+00 : f32
    %91 = vector.broadcast %cst_57 : f32 to vector<64x32xf32>
    %92 = arith.maximumf %90, %91 : vector<64x32xf32>
    %93 = vector.shape_cast %92 : vector<64x32xf32> to vector<2x32x32xf32>
    %cst_58 = arith.constant dense<0.000000e+00> : vector<2x32xf32>
    %94 = vector.multi_reduction <add>, %93, %cst_58 [1] : vector<2x32x32xf32> to vector<2x32xf32>
    %cst_59 = arith.constant 3.200000e+01 : f32
    %95 = vector.broadcast %cst_59 : f32 to vector<2x32xf32>
    %96 = arith.divf %94, %95 : vector<2x32xf32>
    %97 = vector.shape_cast %96 : vector<2x32xf32> to vector<2x1x32xf32>
    %98 = vector.broadcast %97 : vector<2x1x32xf32> to vector<2x32x32xf32>
    %99 = arith.subf %93, %98 : vector<2x32x32xf32>
    %100 = arith.mulf %99, %99 : vector<2x32x32xf32>
    %cst_60 = arith.constant dense<0.000000e+00> : vector<2x32xf32>
    %101 = vector.multi_reduction <add>, %100, %cst_60 [1] : vector<2x32x32xf32> to vector<2x32xf32>
    %cst_61 = arith.constant 0.0322580636 : f32
    %102 = vector.broadcast %cst_61 : f32 to vector<2x32xf32>
    %103 = arith.mulf %101, %102 : vector<2x32xf32>
    %104 = math.sqrt %103 : vector<2x32xf32>
    %c272 = arith.constant 272 : index
    %c0_62 = arith.constant 0 : index
    %105 = vector.load %arg1[%c272, %c0_62] : memref<368x32xf32, #tpu.memory_space<vmem>>, vector<32x16xf32>
    %c304 = arith.constant 304 : index
    %c0_63 = arith.constant 0 : index
    %106 = vector.load %arg1[%c304, %c0_63] : memref<368x32xf32, #tpu.memory_space<vmem>>, vector<32x16xf32>
    %cst_64 = arith.constant dense<0.000000e+00> : vector<2x16xf32>
    %107 = tpu.matmul %96, %105, %cst_64 {dimension_numbers = #tpu.dot_dimension_numbers<[1], [0], [0], [1], [0, 0, 1, 1], [], []>} : vector<2x32xf32>, vector<32x16xf32>, vector<2x16xf32> -> vector<2x16xf32>
    %cst_65 = arith.constant dense<0.000000e+00> : vector<2x16xf32>
    %108 = tpu.matmul %104, %106, %cst_65 {dimension_numbers = #tpu.dot_dimension_numbers<[1], [0], [0], [1], [0, 0, 1, 1], [], []>} : vector<2x32xf32>, vector<32x16xf32>, vector<2x16xf32> -> vector<2x16xf32>
    %109 = arith.addf %107, %108 : vector<2x16xf32>
    %c1_66 = arith.constant 1 : index
    %c0_67 = arith.constant 0 : index
    %110 = vector.load %arg2[%c1_66, %c0_67] : memref<2x16xf32, #tpu.memory_space<vmem>>, vector<1x16xf32>
    %111 = vector.broadcast %110 : vector<1x16xf32> to vector<2x16xf32>
    %112 = arith.addf %109, %111 : vector<2x16xf32>
    %113 = vector.shape_cast %112 : vector<2x16xf32> to vector<2x1x16xf32>
    %c0_68 = arith.constant 0 : index
    %c0_69 = arith.constant 0 : index
    %c0_70 = arith.constant 0 : index
    %114 = vector.load %arg4[%c0_68, %c0_69, %c0_70] : memref<2x1x16xf32, #tpu.memory_space<vmem>>, vector<2x1x16xf32>
    tpu.vector_store %arg4[%c0_68, %c0_69, %c0_70], %113 {strides = array<i32>} : memref<2x1x16xf32, #tpu.memory_space<vmem>>, vector<2x1x16xf32>,
    %c336 = arith.constant 336 : index
    %c0_71 = arith.constant 0 : index
    %115 = vector.load %arg1[%c336, %c0_71] : memref<368x32xf32, #tpu.memory_space<vmem>>, vector<32x4xf32>
    %cst_72 = arith.constant dense<0.000000e+00> : vector<64x4xf32>
    %116 = tpu.matmul %92, %115, %cst_72 {dimension_numbers = #tpu.dot_dimension_numbers<[1], [0], [0], [1], [0, 0, 1, 1], [], []>} : vector<64x32xf32>, vector<32x4xf32>, vector<64x4xf32> -> vector<64x4xf32>
    %c0_73 = arith.constant 0 : index
    %c0_74 = arith.constant 0 : index
    %117 = vector.load %arg2[%c0_73, %c0_74] : memref<2x16xf32, #tpu.memory_space<vmem>>, vector<1x4xf32>
    %118 = vector.broadcast %117 : vector<1x4xf32> to vector<64x4xf32>
    %119 = arith.addf %116, %118 : vector<64x4xf32>
    %cst_75 = arith.constant dense<0xFF800000> : vector<64xf32>
    %120 = vector.multi_reduction <maximumf>, %119, %cst_75 [1] : vector<64x4xf32> to vector<64xf32>
    %121 = vector.shape_cast %120 : vector<64xf32> to vector<64x1xf32>
    %122 = vector.broadcast %121 : vector<64x1xf32> to vector<64x4xf32>
    %123 = arith.subf %119, %122 : vector<64x4xf32>
    %124 = math.exp %123 : vector<64x4xf32>
    %cst_76 = arith.constant dense<0.000000e+00> : vector<64xf32>
    %125 = vector.multi_reduction <add>, %124, %cst_76 [1] : vector<64x4xf32> to vector<64xf32>
    %126 = vector.shape_cast %125 : vector<64xf32> to vector<64x1xf32>
    %127 = tpu.reciprocal %126 {approx = true} : vector<64x1xf32> -> vector<64x1xf32>
    %128 = vector.broadcast %127 : vector<64x1xf32> to vector<64x4xf32>
    %129 = arith.mulf %124, %128 : vector<64x4xf32>
    %130 = vector.shape_cast %129 : vector<64x4xf32> to vector<2x32x4xf32>
    %c0_77 = arith.constant 0 : index
    %c0_78 = arith.constant 0 : index
    %c0_79 = arith.constant 0 : index
    %131 = vector.load %arg3[%c0_77, %c0_78, %c0_79] : memref<2x32x4xf32, #tpu.memory_space<vmem>>, vector<2x32x4xf32>
    tpu.vector_store %arg3[%c0_77, %c0_78, %c0_79], %130 {strides = array<i32>} : memref<2x32x4xf32, #tpu.memory_space<vmem>>, vector<2x32x4xf32>,
    return
  }
}

</mosaic_0001>

<llo_original>
// kernel: tcn_sep_forward.1
$region0: #{tcn_sep_forward.1}
  #allocation0 [shape = 'u32[]', space=smem, size = 0x4, offset = 0x4, fixed_abs, tag = 'smem constant byte address 0x4 - core index']
  #allocation1 [shape = 'u32[144,128]{1,0:T(1,128)}', space=vmem, size = 0x12000, scoped, tag = 'internal scratch']
  #allocation2 [shape = 'f32[2,40,32]{2,1,0:T(8,128)}', space=vmem, size = 0xa000, scoped, tag = 'scratch operand']
  %s0 = inlined_call_operand.vmem [shape: f32[2,34,23], index: 0, kind: input, shape index: {}]
  %s1 = inlined_call_operand.vmem [shape: f32[368,32], index: 1, kind: input, shape index: {}]
  %s2 = inlined_call_operand.vmem [shape: f32[2,16], index: 2, kind: input, shape index: {}]
  %s3 = inlined_call_operand.vmem [shape: f32[2,32,4], index: 3, kind: output, shape index: {0}]
  %s4 = inlined_call_operand.hbm [shape: f32[2,1,16], index: 4, kind: output, shape index: {1}]
  %5 = xla_tuple %s3, %s4
  %s6 = sld [smem:[#allocation0]]
  $region30: #{tcn_sep_forward.1} parent=0
    _
  %s8 = ssub.s32 1, %s6
  %s9 = scalar_select 0, %s8, %s6
  $region1: #{tcn_sep_forward.1} parent=0
    #allocation3 [shape = 'u8[1024]{0}', space=vmem, size = 0x400, scoped, tag = 'output window, operand 1, single buffered']
    #allocation4 [shape = 's32[1]{0}', space=sflag, size = 0x4, scoped, tag = 'scoped memory for tcn_sep_forward.1']
    %10 = vsyncpa [#allocation4], 0
    // Predicated region
    $region2: #{tcn_sep_forward.1} parent=1 // pred_check
      _
    $region3: #{tcn_sep_forward.1} parent=1 // pred_check_branch
      %12 = sbr.rel (0) target = $region5
    $region4: #{tcn_sep_forward.1} parent=1 // pred_region
      _
    $region5: #{tcn_sep_forward.1} parent=1 // pred_fallthru
      _
    // Predicated region
    $region6: #{tcn_sep_forward.1} parent=1 // pred_check
      _
    $region7: #{tcn_sep_forward.1} parent=1 // pred_check_branch
      %14 = sbr.rel (0) target = $region9
    $region8: #{tcn_sep_forward.1} parent=1 // pred_region
      _
    $region9: #{tcn_sep_forward.1} parent=1 // pred_fallthru
      _
    // Predicated region
    $region10: #{tcn_sep_forward.1} parent=1 // pred_check
      _
    $region11: #{tcn_sep_forward.1} parent=1 // pred_check_branch
      %16 = sbr.rel (0) target = $region13
    $region12: #{tcn_sep_forward.1} parent=1 // pred_region
      _
    $region13: #{tcn_sep_forward.1} parent=1 // pred_fallthru
      _
    %v17 = vld [vmem:[%s0] sm:$0xff]
    %v18 = vld [vmem:[%s0 + $0x8] sm:$0xff]
    %v19 = vld [vmem:[%s0 + $0x10] sm:$0xff]
    %v20 = vld [vmem:[%s0 + $0x18] sm:$0xff]
    %v21 = vld [vmem:[%s0 + $0x28] sm:$0xff]
    %v22 = vld [vmem:[%s0 + $0x30] sm:$0xff]
    %v23 = vld [vmem:[%s0 + $0x38] sm:$0xff]
    %v24 = vld [vmem:[%s0 + $0x40] sm:$0xff]
    %v25 = vld [vmem:[%s0 + $0x1] sm:$0xff]
    %v26 = vld [vmem:[%s0 + $0x9] sm:$0xff]
    %v27 = vld [vmem:[%s0 + $0x11] sm:$0xff]
    %v28 = vld [vmem:[%s0 + $0x19] sm:$0xff]
    %v29 = vld [vmem:[%s0 + $0x29] sm:$0xff]
    %v30 = vld [vmem:[%s0 + $0x31] sm:$0xff]
    %v31 = vld [vmem:[%s0 + $0x39] sm:$0xff]
    %v32 = vld [vmem:[%s0 + $0x41] sm:$0xff]
    %v33 = vld [vmem:[%s0 + $0x2] sm:$0xff]
    %v34 = vld [vmem:[%s0 + $0xa] sm:$0xff]
    %v35 = vld [vmem:[%s0 + $0x12] sm:$0xff]
    %v36 = vld [vmem:[%s0 + $0x1a] sm:$0xff]
    %v37 = vld [vmem:[%s0 + $0x2a] sm:$0xff]
    %v38 = vld [vmem:[%s0 + $0x32] sm:$0xff]
    %v39 = vld [vmem:[%s0 + $0x3a] sm:$0xff]
    %v40 = vld [vmem:[%s0 + $0x42] sm:$0xff]
    %49 = vrot.lane.b32.xlu0 %v25, 23
    %v50 = vpop.permute.xlu0 %49
    %51 = vrot.lane.b32.xlu0 %v26, 23
    %v52 = vpop.permute.xlu0 %51
    %53 = vrot.lane.b32.xlu0 %v27, 23
    %v54 = vpop.permute.xlu0 %53
    %55 = vrot.lane.b32.xlu0 %v28, 23
    %v56 = vpop.permute.xlu0 %55
    %57 = vrot.lane.b32.xlu0 %v29, 23
    %v58 = vpop.permute.xlu0 %57
    %59 = vrot.lane.b32.xlu0 %v30, 23
    %v60 = vpop.permute.xlu0 %59
    %61 = vrot.lane.b32.xlu0 %v31, 23
    %v62 = vpop.permute.xlu0 %61
    %63 = vrot.lane.b32.xlu0 %v32, 23
    %v64 = vpop.permute.xlu0 %63
    %81 = vrot.lane.b32.xlu0 %v33, 46
    %v82 = vpop.permute.xlu0 %81
    %83 = vrot.lane.b32.xlu0 %v34, 46
    %v84 = vpop.permute.xlu0 %83
    %85 = vrot.lane.b32.xlu0 %v35, 46
    %v86 = vpop.permute.xlu0 %85
    %87 = vrot.lane.b32.xlu0 %v36, 46
    %v88 = vpop.permute.xlu0 %87
    %89 = vrot.lane.b32.xlu0 %v37, 46
    %v90 = vpop.permute.xlu0 %89
    %91 = vrot.lane.b32.xlu0 %v38, 46
    %v92 = vpop.permute.xlu0 %91
    %93 = vrot.lane.b32.xlu0 %v39, 46
    %v94 = vpop.permute.xlu0 %93
    %95 = vrot.lane.b32.xlu0 %v40, 46
    %v96 = vpop.permute.xlu0 %95
    %vm105 = vcmask 187392
    %v106 = vsel %vm105, %v17, %v50
    %v107 = vsel %vm105, %v18, %v52
    %v108 = vsel %vm105, %v19, %v54
    %v109 = vsel %vm105, %v20, %v56
    %v110 = vsel %vm105, %v21, %v58
    %v111 = vsel %vm105, %v22, %v60
    %v112 = vsel %vm105, %v23, %v62
    %v113 = vsel %vm105, %v24, %v64
    %vm114 = vcmask 375808
    %v115 = vsel %vm114, %v106, %v82
    %v116 = vsel %vm114, %v107, %v84
    %v117 = vsel %vm114, %v108, %v86
    %v118 = vsel %vm114, %v109, %v88
    %v119 = vsel %vm114, %v110, %v90
    %v120 = vsel %vm114, %v111, %v92
    %v121 = vsel %vm114, %v112, %v94
    %v122 = vsel %vm114, %v113, %v96
    %v123 = vld [vmem:[%s1] sm:$0xff]
    %v124 = vld [vmem:[%s1 + $0x8] sm:$0xff]
    %v125 = vld [vmem:[%s1 + $0x10] sm:$0xff]
    %v126 = vld [vmem:[%s1 + $0x18] sm:$0xff]
    %v127 = vld [vmem:[%s1 + $0x20] sm:$0xff]
    %v128 = vld [vmem:[%s1 + $0x28] sm:$0xff]
    %v129 = vld [vmem:[%s1 + $0x30] sm:$0xff]
    %v130 = vld [vmem:[%s1 + $0x38] sm:$0xff]
    %v131 = vld [vmem:[%s1 + $0x40] sm:$0x1f]
    %vm132 = vcmask 564224
    %v134 = vsel %vm132, %v115, 0
    %v137 = vsel %vm132, %v116, 0
    %v140 = vsel %vm132, %v117, 0
    %v143 = vsel %vm132, %v118, 0
    %v146 = vsel %vm132, %v119, 0
    %v149 = vsel %vm132, %v120, 0
    %v152 = vsel %vm132, %v121, 0
    %v155 = vsel %vm132, %v122, 0
    %vm157 = vcmask 1044480
    %v159 = vsel %vm157, %v131, 0
    %161 = vmatprep.subr.mxu0 0.0
    %162 = vmatpush1.msra.mxu0 %v123
    %163 = vmatprep.subr.mxu0 0.0
    %164 = vmatpush1.msra.mxu0 %v124
    %165 = vmatprep.subr.mxu0 0.0
    %166 = vmatpush1.msra.mxu0 %v125
    %167 = vmatprep.subr.mxu0 0.0
    %168 = vmatpush1.msra.mxu0 %v126
    %169 = vmatprep.subr.mxu0 0.0
    %170 = vmatpush1.msra.mxu0 %v127
    %171 = vmatprep.subr.mxu0 0.0
    %172 = vmatpush1.msra.mxu0 %v128
    %173 = vmatprep.subr.mxu0 0.0
    %174 = vmatpush1.msra.mxu0 %v129
    %175 = vmatprep.subr.mxu0 0.0
    %176 = vmatpush1.msra.mxu0 %v130
    %177 = vmatprep.subr.mxu0 0.0
    %178 = vmatpush1.msra.mxu0 %v159
    %179 = vmatprep.subr.mxu0 0.0
    %180 = vmatpush1.msra.mxu0 0.0
    %181 = vmatprep.subr.mxu0 0.0
    %182 = vmatpush1.msra.mxu0 0.0
    %183 = vmatprep.subr.mxu0 0.0
    %184 = vmatpush1.msra.mxu0 0.0
    %185 = vmatprep.subr.mxu0 0.0
    %186 = vmatpush1.msra.mxu0 0.0
    %187 = vmatprep.subr.mxu0 0.0
    %188 = vmatpush1.msra.mxu0 0.0
    %189 = vmatprep.subr.mxu0 0.0
    %190 = vmatpush1.msra.mxu0 0.0
    %191 = vmatprep.subr.mxu0 0.0
    %192 = vmatpush1.msra.mxu0 0.0
    %193 = vmatprep.subr.mxu0 0.0
    %194 = vmatpush1.msra.mxu0 0.0
    %195 = vmatprep.subr.mxu0 0.0
    %196 = vmatpush1.msra.mxu0 0.0
    %197 = vmatprep.subr.mxu0 0.0
    %198 = vmatpush1.msra.mxu0 0.0
    %199 = vmatprep.subr.mxu0 0.0
    %200 = vmatpush1.msra.mxu0 0.0
    %201 = vmatprep.subr.mxu0 0.0
    %202 = vmatpush1.msra.mxu0 0.0
    %203 = vmatprep.subr.mxu0 0.0
    %204 = vmatpush1.msra.mxu0 0.0
    %205 = vmatprep.subr.mxu0 0.0
    %206 = vmatpush1.msra.mxu0 0.0
    %207 = vmatprep.subr.mxu0 0.0
    %208 = vmatpush1.msra.mxu0 0.0
    %209 = vmatprep.subr.mxu0 0.0
    %210 = vmatpush1.msra.mxu0 0.0
    %211 = vmatprep.subr.mxu0 0.0
    %212 = vmatpush1.msra.mxu0 0.0
    %213 = vmatprep.subr.mxu0 0.0
    %214 = vmatpush1.msra.mxu0 0.0
    %215 = vmatprep.subr.mxu0 0.0
    %216 = vmatpush1.msra.mxu0 0.0
    %217 = vmatprep.subr.mxu0 0.0
    %218 = vmatpush1.msra.mxu0 0.0
    %219 = vmatprep.subr.mxu0 0.0
    %220 = vmatpush1.msra.mxu0 0.0
    %221 = vmatprep.subr.mxu0 0.0
    %222 = vmatpush1.msra.mxu0 0.0
    %223 = vmatprep.subr.mxu0 0.0
    %224 = vmatpush1.msra.mxu0 0.0
    %225 = vmatprep.mubr.f32.mxu0 0.0
    %226 = vmatmul.mubr.f32.gmra.mrb[0].mxu0 %v134
    %v227 = vpop.f32.mrb[0].mxu0
    %v228 = vadd.f32 0.0, %v227
    %v229 = vpop.f32.mrb[0].mxu0
    %230 = vmatprep.mubr.f32.mxu0 0.0
    %231 = vmatmul.mubr.f32.gmra.mrb[0].mxu0 %v137
    %v232 = vpop.f32.mrb[0].mxu0
    %v233 = vadd.f32 0.0, %v232
    %v234 = vpop.f32.mrb[0].mxu0
    %235 = vmatprep.mubr.f32.mxu0 0.0
    %236 = vmatmul.mubr.f32.gmra.mrb[0].mxu0 %v140
    %v237 = vpop.f32.mrb[0].mxu0
    %v238 = vadd.f32 0.0, %v237
    %v239 = vpop.f32.mrb[0].mxu0
    %240 = vmatprep.mubr.f32.mxu0 0.0
    %241 = vmatmul.mubr.f32.gmra.mrb[0].mxu0 %v143
    %v242 = vpop.f32.mrb[0].mxu0
    %v243 = vadd.f32 0.0, %v242
    %v244 = vpop.f32.mrb[0].mxu0
    %245 = vmatprep.mubr.f32.mxu0 0.0
    %246 = vmatmul.mubr.f32.gmra.mrb[0].mxu0 %v146
    %v247 = vpop.f32.mrb[0].mxu0
    %v248 = vadd.f32 0.0, %v247
    %v249 = vpop.f32.mrb[0].mxu0
    %250 = vmatprep.mubr.f32.mxu0 0.0
    %251 = vmatmul.mubr.f32.gmra.mrb[0].mxu0 %v149
    %v252 = vpop.f32.mrb[0].mxu0
    %v253 = vadd.f32 0.0, %v252
    %v254 = vpop.f32.mrb[0].mxu0
    %255 = vmatprep.mubr.f32.mxu0 0.0
    %256 = vmatmul.mubr.f32.gmra.mrb[0].mxu0 %v152
    %v257 = vpop.f32.mrb[0].mxu0
    %v258 = vadd.f32 0.0, %v257
    %v259 = vpop.f32.mrb[0].mxu0
    %260 = vmatprep.mubr.f32.mxu0 0.0
    %261 = vmatmul.mubr.f32.gmra.mrb[0].mxu0 %v155
    %v262 = vpop.f32.mrb[0].mxu0
    %v263 = vadd.f32 0.0, %v262
    %v264 = vpop.f32.mrb[0].mxu0
    %265 = vdwg.mxu0
    %vm266 = vcmask 261120
    %v267 = vsel %vm266, %v228, 0.0
    %v268 = vsel %vm266, %v233, 0.0
    %v269 = vadd.f32 %v267, %v268
    %v270 = vsel %vm266, %v238, 0.0
    %v271 = vadd.f32 %v269, %v270
    %v272 = vsel %vm266, %v243, 0.0
    %v273 = vadd.f32 %v271, %v272
    %v274 = vsel %vm266, %v248, 0.0
    %v275 = vadd.f32 %v273, %v274
    %v276 = vsel %vm266, %v253, 0.0
    %v277 = vadd.f32 %v275, %v276
    %v278 = vsel %vm266, %v258, 0.0
    %v279 = vadd.f32 %v277, %v278
    %v280 = vsel %vm266, %v263, 0.0
    %v281 = vadd.f32 %v279, %v280
    %v282 = vrot.slane %v281, 4
    %v283 = vadd.f32 %v281, %v282
    %v284 = vrot.slane %v283, 2
    %v285 = vadd.f32 %v283, %v284
    %v286 = vrot.slane %v285, 1
    %v287 = vadd.f32 %v285, %v286
    %v288 = vrcp.pop 64.0
    %v289 = vmul.f32 %v287, %v288
    %v290 = vmul.f32 %v228, %v228
    %v291 = vmul.f32 %v233, %v233
    %v292 = vmul.f32 %v238, %v238
    %v293 = vmul.f32 %v243, %v243
    %v294 = vmul.f32 %v248, %v248
    %v295 = vmul.f32 %v253, %v253
    %v296 = vmul.f32 %v258, %v258
    %v297 = vmul.f32 %v263, %v263
    %v298 = vsel %vm266, %v290, 0.0
    %v299 = vsel %vm266, %v291, 0.0
    %v300 = vadd.f32 %v298, %v299
    %v301 = vsel %vm266, %v292, 0.0
    %v302 = vadd.f32 %v300, %v301
    %v303 = vsel %vm266, %v293, 0.0
    %v304 = vadd.f32 %v302, %v303
    %v305 = vsel %vm266, %v294, 0.0
    %v306 = vadd.f32 %v304, %v305
    %v307 = vsel %vm266, %v295, 0.0
    %v308 = vadd.f32 %v306, %v307
    %v309 = vsel %vm266, %v296, 0.0
    %v310 = vadd.f32 %v308, %v309
    %v311 = vsel %vm266, %v297, 0.0
    %v312 = vadd.f32 %v310, %v311
    %v313 = vrot.slane %v312, 4
    %v314 = vadd.f32 %v312, %v313
    %v315 = vrot.slane %v314, 2
    %v316 = vadd.f32 %v314, %v315
    %v317 = vrot.slane %v316, 1
    %v318 = vadd.f32 %v316, %v317
    %v319 = vmul.f32 %v318, %v288
    %v320 = vmul.f32 %v289, %v289
    %v321 = vsub.f32 %v319, %v320
    %v322 = vmax.f32 %v321, 0.0
    %v323 = vadd.f32 %v322, 1e-05
    %v324 = vrsqrt.pop %v323
    %v325 = vsub.f32 %v228, %v289
    %v326 = vsub.f32 %v233, %v289
    %v327 = vsub.f32 %v238, %v289
    %v328 = vsub.f32 %v243, %v289
    %v329 = vsub.f32 %v248, %v289
    %v330 = vsub.f32 %v253, %v289
    %v331 = vsub.f32 %v258, %v289
    %v332 = vsub.f32 %v263, %v289
    %v333 = vmul.f32 %v325, %v324
    %v334 = vmul.f32 %v326, %v324
    %v335 = vmul.f32 %v327, %v324
    %v336 = vmul.f32 %v328, %v324
    %v337 = vmul.f32 %v329, %v324
    %v338 = vmul.f32 %v330, %v324
    %v339 = vmul.f32 %v331, %v324
    %v340 = vmul.f32 %v332, %v324
    %v341 = vmax.f32 %v333, 0.0
    %v342 = vmax.f32 %v334, 0.0
    %v343 = vmax.f32 %v335, 0.0
    %v344 = vmax.f32 %v336, 0.0
    %v345 = vmax.f32 %v337, 0.0
    %v346 = vmax.f32 %v338, 0.0
    %v347 = vmax.f32 %v339, 0.0
    %v348 = vmax.f32 %v340, 0.0
    %349 = vst.msk [vmem:[#allocation2] sm:$0xff] %vm266, 0.0
    %350 = vst.msk [vmem:[#allocation2 + $0x28] sm:$0xff] %vm266, 0.0
    %351 = vst.msk [vmem:[#allocation2 + $0x8] sm:$0xff] %vm266, %v341
    %352 = vst.msk [vmem:[#allocation2 + $0x10] sm:$0xff] %vm266, %v342
    %353 = vst.msk [vmem:[#allocation2 + $0x18] sm:$0xff] %vm266, %v343
    %354 = vst.msk [vmem:[#allocation2 + $0x20] sm:$0xff] %vm266, %v344
    %355 = vst.msk [vmem:[#allocation2 + $0x30] sm:$0xff] %vm266, %v345
    %356 = vst.msk [vmem:[#allocation2 + $0x38] sm:$0xff] %vm266, %v346
    %357 = vst.msk [vmem:[#allocation2 + $0x40] sm:$0xff] %vm266, %v347
    %358 = vst.msk [vmem:[#allocation2 + $0x48] sm:$0xff] %vm266, %v348
    %v359 = vld [vmem:[#allocation2 + $0x4] sm:$0xff]
    %v360 = vld [vmem:[#allocation2 + $0xc] sm:$0xff]
    %v361 = vld [vmem:[#allocation2 + $0x14] sm:$0xff]
    %v362 = vld [vmem:[#allocation2 + $0x1c] sm:$0xff]
    %v363 = vld [vmem:[#allocation2 + $0x2c] sm:$0xff]
    %v364 = vld [vmem:[#allocation2 + $0x34] sm:$0xff]
    %v365 = vld [vmem:[#allocation2 + $0x3c] sm:$0xff]
    %v366 = vld [vmem:[#allocation2 + $0x44] sm:$0xff]
    %v367 = vld [vmem:[#allocation2 + $0x6] sm:$0xff]
    %v368 = vld [vmem:[#allocation2 + $0xe] sm:$0xff]
    %v369 = vld [vmem:[#allocation2 + $0x16] sm:$0xff]
    %v370 = vld [vmem:[#allocation2 + $0x1e] sm:$0xff]
    %v371 = vld [vmem:[#allocation2 + $0x2e] sm:$0xff]
    %v372 = vld [vmem:[#allocation2 + $0x36] sm:$0xff]
    %v373 = vld [vmem:[#allocation2 + $0x3e] sm:$0xff]
    %v374 = vld [vmem:[#allocation2 + $0x46] sm:$0xff]
    %v375 = vld [vmem:[#allocation2 + $0x8] sm:$0xff]
    %v376 = vld [vmem:[#allocation2 + $0x10] sm:$0xff]
    %v377 = vld [vmem:[#allocation2 + $0x18] sm:$0xff]
    %v378 = vld [vmem:[#allocation2 + $0x20] sm:$0xff]
    %v379 = vld [vmem:[#allocation2 + $0x30] sm:$0xff]
    %v380 = vld [vmem:[#allocation2 + $0x38] sm:$0xff]
    %v381 = vld [vmem:[#allocation2 + $0x40] sm:$0xff]
    %v382 = vld [vmem:[#allocation2 + $0x48] sm:$0xff]
    %391 = vrot.lane.b32.xlu0 %v367, 32
    %v392 = vpop.permute.xlu0 %391
    %393 = vrot.lane.b32.xlu0 %v368, 32
    %v394 = vpop.permute.xlu0 %393
    %395 = vrot.lane.b32.xlu0 %v369, 32
    %v396 = vpop.permute.xlu0 %395
    %397 = vrot.lane.b32.xlu0 %v370, 32
    %v398 = vpop.permute.xlu0 %397
    %399 = vrot.lane.b32.xlu0 %v371, 32
    %v400 = vpop.permute.xlu0 %399
    %401 = vrot.lane.b32.xlu0 %v372, 32
    %v402 = vpop.permute.xlu0 %401
    %403 = vrot.lane.b32.xlu0 %v373, 32
    %v404 = vpop.permute.xlu0 %403
    %405 = vrot.lane.b32.xlu0 %v374, 32
    %v406 = vpop.permute.xlu0 %405
    %423 = vrot.lane.b32.xlu0 %v375, 64
    %v424 = vpop.permute.xlu0 %423
    %425 = vrot.lane.b32.xlu0 %v376, 64
    %v426 = vpop.permute.xlu0 %425
    %427 = vrot.lane.b32.xlu0 %v377, 64
    %v428 = vpop.permute.xlu0 %427
    %429 = vrot.lane.b32.xlu0 %v378, 64
    %v430 = vpop.permute.xlu0 %429
    %431 = vrot.lane.b32.xlu0 %v379, 64
    %v432 = vpop.permute.xlu0 %431
    %433 = vrot.lane.b32.xlu0 %v380, 64
    %v434 = vpop.permute.xlu0 %433
    %435 = vrot.lane.b32.xlu0 %v381, 64
    %v436 = vpop.permute.xlu0 %435
    %437 = vrot.lane.b32.xlu0 %v382, 64
    %v438 = vpop.permute.xlu0 %437
    %v447 = vsel %vm266, %v359, %v392
    %v448 = vsel %vm266, %v360, %v394
    %v449 = vsel %vm266, %v361, %v396
    %v450 = vsel %vm266, %v362, %v398
    %v451 = vsel %vm266, %v363, %v400
    %v452 = vsel %vm266, %v364, %v402
    %v453 = vsel %vm266, %v365, %v404
    %v454 = vsel %vm266, %v366, %v406
    %vm455 = vcmask 523264
    %v456 = vsel %vm455, %v447, %v424
    %v457 = vsel %vm455, %v448, %v426
    %v458 = vsel %vm455, %v449, %v428
    %v459 = vsel %vm455, %v450, %v430
    %v460 = vsel %vm455, %v451, %v432
    %v461 = vsel %vm455, %v452, %v434
    %v462 = vsel %vm455, %v453, %v436
    %v463 = vsel %vm455, %v454, %v438
    %v464 = vld [vmem:[%s1 + $0x50] sm:$0xff]
    %v465 = vld [vmem:[%s1 + $0x58] sm:$0xff]
    %v466 = vld [vmem:[%s1 + $0x60] sm:$0xff]
    %v467 = vld [vmem:[%s1 + $0x68] sm:$0xff]
    %v468 = vld [vmem:[%s1 + $0x70] sm:$0xff]
    %v469 = vld [vmem:[%s1 + $0x78] sm:$0xff]
    %v470 = vld [vmem:[%s1 + $0x80] sm:$0xff]
    %v471 = vld [vmem:[%s1 + $0x88] sm:$0xff]
    %v472 = vld [vmem:[%s1 + $0x90] sm:$0xff]
    %v473 = vld [vmem:[%s1 + $0x98] sm:$0xff]
    %v474 = vld [vmem:[%s1 + $0xa0] sm:$0xff]
    %v475 = vld [vmem:[%s1 + $0xa8] sm:$0xff]
    %vm476 = vcmask 785408
    %v478 = vsel %vm476, %v456, 0
    %v481 = vsel %vm476, %v457, 0
    %v484 = vsel %vm476, %v458, 0
    %v487 = vsel %vm476, %v459, 0
    %v490 = vsel %vm476, %v460, 0
    %v493 = vsel %vm476, %v461, 0
    %v496 = vsel %vm476, %v462, 0
    %v499 = vsel %vm476, %v463, 0
    %501 = vmatprep.subr.mxu0 0.0
    %502 = vmatpush1.msra.mxu0 %v464
    %503 = vmatprep.subr.mxu0 0.0
    %504 = vmatpush1.msra.mxu0 %v465
    %505 = vmatprep.subr.mxu0 0.0
    %506 = vmatpush1.msra.mxu0 %v466
    %507 = vmatprep.subr.mxu0 0.0
    %508 = vmatpush1.msra.mxu0 %v467
    %509 = vmatprep.subr.mxu0 0.0
    %510 = vmatpush1.msra.mxu0 %v468
    %511 = vmatprep.subr.mxu0 0.0
    %512 = vmatpush1.msra.mxu0 %v469
    %513 = vmatprep.subr.mxu0 0.0
    %514 = vmatpush1.msra.mxu0 %v470
    %515 = vmatprep.subr.mxu0 0.0
    %516 = vmatpush1.msra.mxu0 %v471
    %517 = vmatprep.subr.mxu0 0.0
    %518 = vmatpush1.msra.mxu0 %v472
    %519 = vmatprep.subr.mxu0 0.0
    %520 = vmatpush1.msra.mxu0 %v473
    %521 = vmatprep.subr.mxu0 0.0
    %522 = vmatpush1.msra.mxu0 %v474
    %523 = vmatprep.subr.mxu0 0.0
    %524 = vmatpush1.msra.mxu0 %v475
    %525 = vmatprep.subr.mxu0 0.0
    %526 = vmatpush1.msra.mxu0 0.0
    %527 = vmatprep.subr.mxu0 0.0
    %528 = vmatpush1.msra.mxu0 0.0
    %529 = vmatprep.subr.mxu0 0.0
    %530 = vmatpush1.msra.mxu0 0.0
    %531 = vmatprep.subr.mxu0 0.0
    %532 = vmatpush1.msra.mxu0 0.0
    %533 = vmatprep.subr.mxu0 0.0
    %534 = vmatpush1.msra.mxu0 0.0
    %535 = vmatprep.subr.mxu0 0.0
    %536 = vmatpush1.msra.mxu0 0.0
    %537 = vmatprep.subr.mxu0 0.0
    %538 = vmatpush1.msra.mxu0 0.0
    %539 = vmatprep.subr.mxu0 0.0
    %540 = vmatpush1.msra.mxu0 0.0
    %541 = vmatprep.subr.mxu0 0.0
    %542 = vmatpush1.msra.mxu0 0.0
    %543 = vmatprep.subr.mxu0 0.0
    %544 = vmatpush1.msra.mxu0 0.0
    %545 = vmatprep.subr.mxu0 0.0
    %546 = vmatpush1.msra.mxu0 0.0
    %547 = vmatprep.subr.mxu0 0.0
    %548 = vmatpush1.msra.mxu0 0.0
    %549 = vmatprep.subr.mxu0 0.0
    %550 = vmatpush1.msra.mxu0 0.0
    %551 = vmatprep.subr.mxu0 0.0
    %552 = vmatpush1.msra.mxu0 0.0
    %553 = vmatprep.subr.mxu0 0.0
    %554 = vmatpush1.msra.mxu0 0.0
    %555 = vmatprep.subr.mxu0 0.0
    %556 = vmatpush1.msra.mxu0 0.0
    %557 = vmatprep.subr.mxu0 0.0
    %558 = vmatpush1.msra.mxu0 0.0
    %559 = vmatprep.subr.mxu0 0.0
    %560 = vmatpush1.msra.mxu0 0.0
    %561 = vmatprep.subr.mxu0 0.0
    %562 = vmatpush1.msra.mxu0 0.0
    %563 = vmatprep.subr.mxu0 0.0
    %564 = vmatpush1.msra.mxu0 0.0
    %565 = vmatprep.mubr.f32.mxu0 0.0
    %566 = vmatmul.mubr.f32.gmra.mrb[0].mxu0 %v478
    %v567 = vpop.f32.mrb[0].mxu0
    %v568 = vadd.f32 0.0, %v567
    %v569 = vpop.f32.mrb[0].mxu0
    %570 = vmatprep.mubr.f32.mxu0 0.0
    %571 = vmatmul.mubr.f32.gmra.mrb[0].mxu0 %v481
    %v572 = vpop.f32.mrb[0].mxu0
    %v573 = vadd.f32 0.0, %v572
    %v574 = vpop.f32.mrb[0].mxu0
    %575 = vmatprep.mubr.f32.mxu0 0.0
    %576 = vmatmul.mubr.f32.gmra.mrb[0].mxu0 %v484
    %v577 = vpop.f32.mrb[0].mxu0
    %v578 = vadd.f32 0.0, %v577
    %v579 = vpop.f32.mrb[0].mxu0
    %580 = vmatprep.mubr.f32.mxu0 0.0
    %581 = vmatmul.mubr.f32.gmra.mrb[0].mxu0 %v487
    %v582 = vpop.f32.mrb[0].mxu0
    %v583 = vadd.f32 0.0, %v582
    %v584 = vpop.f32.mrb[0].mxu0
    %585 = vmatprep.mubr.f32.mxu0 0.0
    %586 = vmatmul.mubr.f32.gmra.mrb[0].mxu0 %v490
    %v587 = vpop.f32.mrb[0].mxu0
    %v588 = vadd.f32 0.0, %v587
    %v589 = vpop.f32.mrb[0].mxu0
    %590 = vmatprep.mubr.f32.mxu0 0.0
    %591 = vmatmul.mubr.f32.gmra.mrb[0].mxu0 %v493
    %v592 = vpop.f32.mrb[0].mxu0
    %v593 = vadd.f32 0.0, %v592
    %v594 = vpop.f32.mrb[0].mxu0
    %595 = vmatprep.mubr.f32.mxu0 0.0
    %596 = vmatmul.mubr.f32.gmra.mrb[0].mxu0 %v496
    %v597 = vpop.f32.mrb[0].mxu0
    %v598 = vadd.f32 0.0, %v597
    %v599 = vpop.f32.mrb[0].mxu0
    %600 = vmatprep.mubr.f32.mxu0 0.0
    %601 = vmatmul.mubr.f32.gmra.mrb[0].mxu0 %v499
    %v602 = vpop.f32.mrb[0].mxu0
    %v603 = vadd.f32 0.0, %v602
    %v604 = vpop.f32.mrb[0].mxu0
    %605 = vdwg.mxu0
    %v606 = vsel %vm266, %v568, 0.0
    %v607 = vsel %vm266, %v573, 0.0
    %v608 = vadd.f32 %v606, %v607
    %v609 = vsel %vm266, %v578, 0.0
    %v610 = vadd.f32 %v608, %v609
    %v611 = vsel %vm266, %v583, 0.0
    %v612 = vadd.f32 %v610, %v611
    %v613 = vsel %vm266, %v588, 0.0
    %v614 = vadd.f32 %v612, %v613
    %v615 = vsel %vm266, %v593, 0.0
    %v616 = vadd.f32 %v614, %v615
    %v617 = vsel %vm266, %v598, 0.0
    %v618 = vadd.f32 %v616, %v617
    %v619 = vsel %vm266, %v603, 0.0
    %v620 = vadd.f32 %v618, %v619
    %v621 = vrot.slane %v620, 4
    %v622 = vadd.f32 %v620, %v621
    %v623 = vrot.slane %v622, 2
    %v624 = vadd.f32 %v622, %v623
    %v625 = vrot.slane %v624, 1
    %v626 = vadd.f32 %v624, %v625
    %v627 = vmul.f32 %v626, %v288
    %v628 = vmul.f32 %v568, %v568
    %v629 = vmul.f32 %v573, %v573
    %v630 = vmul.f32 %v578, %v578
    %v631 = vmul.f32 %v583, %v583
    %v632 = vmul.f32 %v588, %v588
    %v633 = vmul.f32 %v593, %v593
    %v634 = vmul.f32 %v598, %v598
    %v635 = vmul.f32 %v603, %v603
    %v636 = vsel %vm266, %v628, 0.0
    %v637 = vsel %vm266, %v629, 0.0
    %v638 = vadd.f32 %v636, %v637
    %v639 = vsel %vm266, %v630, 0.0
    %v640 = vadd.f32 %v638, %v639
    %v641 = vsel %vm266, %v631, 0.0
    %v642 = vadd.f32 %v640, %v641
    %v643 = vsel %vm266, %v632, 0.0
    %v644 = vadd.f32 %v642, %v643
    %v645 = vsel %vm266, %v633, 0.0
    %v646 = vadd.f32 %v644, %v645
    %v647 = vsel %vm266, %v634, 0.0
    %v648 = vadd.f32 %v646, %v647
    %v649 = vsel %vm266, %v635, 0.0
    %v650 = vadd.f32 %v648, %v649
    %v651 = vrot.slane %v650, 4
    %v652 = vadd.f32 %v650, %v651
    %v653 = vrot.slane %v652, 2
    %v654 = vadd.f32 %v652, %v653
    %v655 = vrot.slane %v654, 1
    %v656 = vadd.f32 %v654, %v655
    %v657 = vmul.f32 %v656, %v288
    %v658 = vmul.f32 %v627, %v627
    %v659 = vsub.f32 %v657, %v658
    %v660 = vmax.f32 %v659, 0.0
    %v661 = vadd.f32 %v660, 1e-05
    %v662 = vrsqrt.pop %v661
    %v663 = vsub.f32 %v568, %v627
    %v664 = vsub.f32 %v573, %v627
    %v665 = vsub.f32 %v578, %v627
    %v666 = vsub.f32 %v583, %v627
    %v667 = vsub.f32 %v588, %v627
    %v668 = vsub.f32 %v593, %v627
    %v669 = vsub.f32 %v598, %v627
    %v670 = vsub.f32 %v603, %v627
    %v671 = vmul.f32 %v663, %v662
    %v672 = vmul.f32 %v664, %v662
    %v673 = vmul.f32 %v665, %v662
    %v674 = vmul.f32 %v666, %v662
    %v675 = vmul.f32 %v667, %v662
    %v676 = vmul.f32 %v668, %v662
    %v677 = vmul.f32 %v669, %v662
    %v678 = vmul.f32 %v670, %v662
    %v679 = vmax.f32 %v671, 0.0
    %v680 = vmax.f32 %v672, 0.0
    %v681 = vmax.f32 %v673, 0.0
    %v682 = vmax.f32 %v674, 0.0
    %v683 = vmax.f32 %v675, 0.0
    %v684 = vmax.f32 %v676, 0.0
    %v685 = vmax.f32 %v677, 0.0
    %v686 = vmax.f32 %v678, 0.0
    %687 = vst.msk [vmem:[#allocation2 + $0x8] sm:$0xff] %vm266, %v679
    %688 = vst.msk [vmem:[#allocation2 + $0x10] sm:$0xff] %vm266, %v680
    %689 = vst.msk [vmem:[#allocation2 + $0x18] sm:$0xff] %vm266, %v681
    %690 = vst.msk [vmem:[#allocation2 + $0x20] sm:$0xff] %vm266, %v682
    %691 = vst.msk [vmem:[#allocation2 + $0x30] sm:$0xff] %vm266, %v683
    %692 = vst.msk [vmem:[#allocation2 + $0x38] sm:$0xff] %vm266, %v684
    %693 = vst.msk [vmem:[#allocation2 + $0x40] sm:$0xff] %vm266, %v685
    %694 = vst.msk [vmem:[#allocation2 + $0x48] sm:$0xff] %vm266, %v686
    %v695 = vld [vmem:[#allocation2] sm:$0xff]
    %v696 = vld [vmem:[#allocation2 + $0x8] sm:$0xff]
    %v697 = vld [vmem:[#allocation2 + $0x10] sm:$0xff]
    %v698 = vld [vmem:[#allocation2 + $0x18] sm:$0xff]
    %v699 = vld [vmem:[#allocation2 + $0x28] sm:$0xff]
    %v700 = vld [vmem:[#allocation2 + $0x30] sm:$0xff]
    %v701 = vld [vmem:[#allocation2 + $0x38] sm:$0xff]
    %v702 = vld [vmem:[#allocation2 + $0x40] sm:$0xff]
    %v703 = vld [vmem:[#allocation2 + $0x4] sm:$0xff]
    %v704 = vld [vmem:[#allocation2 + $0xc] sm:$0xff]
    %v705 = vld [vmem:[#allocation2 + $0x14] sm:$0xff]
    %v706 = vld [vmem:[#allocation2 + $0x1c] sm:$0xff]
    %v707 = vld [vmem:[#allocation2 + $0x2c] sm:$0xff]
    %v708 = vld [vmem:[#allocation2 + $0x34] sm:$0xff]
    %v709 = vld [vmem:[#allocation2 + $0x3c] sm:$0xff]
    %v710 = vld [vmem:[#allocation2 + $0x44] sm:$0xff]
    %v711 = vld [vmem:[#allocation2 + $0x20] sm:$0xff]
    %v712 = vld [vmem:[#allocation2 + $0x48] sm:$0xff]
    %721 = vrot.lane.b32.xlu0 %v703, 32
    %v722 = vpop.permute.xlu0 %721
    %723 = vrot.lane.b32.xlu0 %v704, 32
    %v724 = vpop.permute.xlu0 %723
    %725 = vrot.lane.b32.xlu0 %v705, 32
    %v726 = vpop.permute.xlu0 %725
    %727 = vrot.lane.b32.xlu0 %v706, 32
    %v728 = vpop.permute.xlu0 %727
    %729 = vrot.lane.b32.xlu0 %v707, 32
    %v730 = vpop.permute.xlu0 %729
    %731 = vrot.lane.b32.xlu0 %v708, 32
    %v732 = vpop.permute.xlu0 %731
    %733 = vrot.lane.b32.xlu0 %v709, 32
    %v734 = vpop.permute.xlu0 %733
    %735 = vrot.lane.b32.xlu0 %v710, 32
    %v736 = vpop.permute.xlu0 %735
    %753 = vrot.lane.b32.xlu0 %v696, 64
    %v754 = vpop.permute.xlu0 %753
    %755 = vrot.lane.b32.xlu0 %v697, 64
    %v756 = vpop.permute.xlu0 %755
    %757 = vrot.lane.b32.xlu0 %v698, 64
    %v758 = vpop.permute.xlu0 %757
    %759 = vrot.lane.b32.xlu0 %v711, 64
    %v760 = vpop.permute.xlu0 %759
    %761 = vrot.lane.b32.xlu0 %v700, 64
    %v762 = vpop.permute.xlu0 %761
    %763 = vrot.lane.b32.xlu0 %v701, 64
    %v764 = vpop.permute.xlu0 %763
    %765 = vrot.lane.b32.xlu0 %v702, 64
    %v766 = vpop.permute.xlu0 %765
    %767 = vrot.lane.b32.xlu0 %v712, 64
    %v768 = vpop.permute.xlu0 %767
    %v777 = vsel %vm266, %v695, %v722
    %v778 = vsel %vm266, %v696, %v724
    %v779 = vsel %vm266, %v697, %v726
    %v780 = vsel %vm266, %v698, %v728
    %v781 = vsel %vm266, %v699, %v730
    %v782 = vsel %vm266, %v700, %v732
    %v783 = vsel %vm266, %v701, %v734
    %v784 = vsel %vm266, %v702, %v736
    %v785 = vsel %vm455, %v777, %v754
    %v786 = vsel %vm455, %v778, %v756
    %v787 = vsel %vm455, %v779, %v758
    %v788 = vsel %vm455, %v780, %v760
    %v789 = vsel %vm455, %v781, %v762
    %v790 = vsel %vm455, %v782, %v764
    %v791 = vsel %vm455, %v783, %v766
    %v792 = vsel %vm455, %v784, %v768
    %v793 = vld [vmem:[%s1 + $0xb0] sm:$0xff]
    %v794 = vld [vmem:[%s1 + $0xb8] sm:$0xff]
    %v795 = vld [vmem:[%s1 + $0xc0] sm:$0xff]
    %v796 = vld [vmem:[%s1 + $0xc8] sm:$0xff]
    %v797 = vld [vmem:[%s1 + $0xd0] sm:$0xff]
    %v798 = vld [vmem:[%s1 + $0xd8] sm:$0xff]
    %v799 = vld [vmem:[%s1 + $0xe0] sm:$0xff]
    %v800 = vld [vmem:[%s1 + $0xe8] sm:$0xff]
    %v801 = vld [vmem:[%s1 + $0xf0] sm:$0xff]
    %v802 = vld [vmem:[%s1 + $0xf8] sm:$0xff]
    %v803 = vld [vmem:[%s1 + $0x100] sm:$0xff]
    %v804 = vld [vmem:[%s1 + $0x108] sm:$0xff]
    %v806 = vsel %vm476, %v785, 0
    %v809 = vsel %vm476, %v786, 0
    %v812 = vsel %vm476, %v787, 0
    %v815 = vsel %vm476, %v788, 0
    %v818 = vsel %vm476, %v789, 0
    %v821 = vsel %vm476, %v790, 0
    %v824 = vsel %vm476, %v791, 0
    %v827 = vsel %vm476, %v792, 0
    %829 = vmatprep.subr.mxu0 0.0
    %830 = vmatpush1.msra.mxu0 %v793
    %831 = vmatprep.subr.mxu0 0.0
    %832 = vmatpush1.msra.mxu0 %v794
    %833 = vmatprep.subr.mxu0 0.0
    %834 = vmatpush1.msra.mxu0 %v795
    %835 = vmatprep.subr.mxu0 0.0
    %836 = vmatpush1.msra.mxu0 %v796
    %837 = vmatprep.subr.mxu0 0.0
    %838 = vmatpush1.msra.mxu0 %v797
    %839 = vmatprep.subr.mxu0 0.0
    %840 = vmatpush1.msra.mxu0 %v798
    %841 = vmatprep.subr.mxu0 0.0
    %842 = vmatpush1.msra.mxu0 %v799
    %843 = vmatprep.subr.mxu0 0.0
    %844 = vmatpush1.msra.mxu0 %v800
    %845 = vmatprep.subr.mxu0 0.0
    %846 = vmatpush1.msra.mxu0 %v801
    %847 = vmatprep.subr.mxu0 0.0
    %848 = vmatpush1.msra.mxu0 %v802
    %849 = vmatprep.subr.mxu0 0.0
    %850 = vmatpush1.msra.mxu0 %v803
    %851 = vmatprep.subr.mxu0 0.0
    %852 = vmatpush1.msra.mxu0 %v804
    %853 = vmatprep.subr.mxu0 0.0
    %854 = vmatpush1.msra.mxu0 0.0
    %855 = vmatprep.subr.mxu0 0.0
    %856 = vmatpush1.msra.mxu0 0.0
    %857 = vmatprep.subr.mxu0 0.0
    %858 = vmatpush1.msra.mxu0 0.0
    %859 = vmatprep.subr.mxu0 0.0
    %860 = vmatpush1.msra.mxu0 0.0
    %861 = vmatprep.subr.mxu0 0.0
    %862 = vmatpush1.msra.mxu0 0.0
    %863 = vmatprep.subr.mxu0 0.0
    %864 = vmatpush1.msra.mxu0 0.0
    %865 = vmatprep.subr.mxu0 0.0
    %866 = vmatpush1.msra.mxu0 0.0
    %867 = vmatprep.subr.mxu0 0.0
    %868 = vmatpush1.msra.mxu0 0.0
    %869 = vmatprep.subr.mxu0 0.0
    %870 = vmatpush1.msra.mxu0 0.0
    %871 = vmatprep.subr.mxu0 0.0
    %872 = vmatpush1.msra.mxu0 0.0
    %873 = vmatprep.subr.mxu0 0.0
    %874 = vmatpush1.msra.mxu0 0.0
    %875 = vmatprep.subr.mxu0 0.0
    %876 = vmatpush1.msra.mxu0 0.0
    %877 = vmatprep.subr.mxu0 0.0
    %878 = vmatpush1.msra.mxu0 0.0
    %879 = vmatprep.subr.mxu0 0.0
    %880 = vmatpush1.msra.mxu0 0.0
    %881 = vmatprep.subr.mxu0 0.0
    %882 = vmatpush1.msra.mxu0 0.0
    %883 = vmatprep.subr.mxu0 0.0
    %884 = vmatpush1.msra.mxu0 0.0
    %885 = vmatprep.subr.mxu0 0.0
    %886 = vmatpush1.msra.mxu0 0.0
    %887 = vmatprep.subr.mxu0 0.0
    %888 = vmatpush1.msra.mxu0 0.0
    %889 = vmatprep.subr.mxu0 0.0
    %890 = vmatpush1.msra.mxu0 0.0
    %891 = vmatprep.subr.mxu0 0.0
    %892 = vmatpush1.msra.mxu0 0.0
    %893 = vmatprep.mubr.f32.mxu0 0.0
    %894 = vmatmul.mubr.f32.gmra.mrb[0].mxu0 %v806
    %v895 = vpop.f32.mrb[0].mxu0
    %v896 = vadd.f32 0.0, %v895
    %v897 = vpop.f32.mrb[0].mxu0
    %898 = vmatprep.mubr.f32.mxu0 0.0
    %899 = vmatmul.mubr.f32.gmra.mrb[0].mxu0 %v809
    %v900 = vpop.f32.mrb[0].mxu0
    %v901 = vadd.f32 0.0, %v900
    %v902 = vpop.f32.mrb[0].mxu0
    %903 = vmatprep.mubr.f32.mxu0 0.0
    %904 = vmatmul.mubr.f32.gmra.mrb[0].mxu0 %v812
    %v905 = vpop.f32.mrb[0].mxu0
    %v906 = vadd.f32 0.0, %v905
    %v907 = vpop.f32.mrb[0].mxu0
    %908 = vmatprep.mubr.f32.mxu0 0.0
    %909 = vmatmul.mubr.f32.gmra.mrb[0].mxu0 %v815
    %v910 = vpop.f32.mrb[0].mxu0
    %v911 = vadd.f32 0.0, %v910
    %v912 = vpop.f32.mrb[0].mxu0
    %913 = vmatprep.mubr.f32.mxu0 0.0
    %914 = vmatmul.mubr.f32.gmra.mrb[0].mxu0 %v818
    %v915 = vpop.f32.mrb[0].mxu0
    %v916 = vadd.f32 0.0, %v915
    %v917 = vpop.f32.mrb[0].mxu0
    %918 = vmatprep.mubr.f32.mxu0 0.0
    %919 = vmatmul.mubr.f32.gmra.mrb[0].mxu0 %v821
    %v920 = vpop.f32.mrb[0].mxu0
    %v921 = vadd.f32 0.0, %v920
    %v922 = vpop.f32.mrb[0].mxu0
    %923 = vmatprep.mubr.f32.mxu0 0.0
    %924 = vmatmul.mubr.f32.gmra.mrb[0].mxu0 %v824
    %v925 = vpop.f32.mrb[0].mxu0
    %v926 = vadd.f32 0.0, %v925
    %v927 = vpop.f32.mrb[0].mxu0
    %928 = vmatprep.mubr.f32.mxu0 0.0
    %929 = vmatmul.mubr.f32.gmra.mrb[0].mxu0 %v827
    %v930 = vpop.f32.mrb[0].mxu0
    %v931 = vadd.f32 0.0, %v930
    %v932 = vpop.f32.mrb[0].mxu0
    %933 = vdwg.mxu0
    %v934 = vsel %vm266, %v896, 0.0
    %v935 = vsel %vm266, %v901, 0.0
    %v936 = vadd.f32 %v934, %v935
    %v937 = vsel %vm266, %v906, 0.0
    %v938 = vadd.f32 %v936, %v937
    %v939 = vsel %vm266, %v911, 0.0
    %v940 = vadd.f32 %v938, %v939
    %v941 = vsel %vm266, %v916, 0.0
    %v942 = vadd.f32 %v940, %v941
    %v943 = vsel %vm266, %v921, 0.0
    %v944 = vadd.f32 %v942, %v943
    %v945 = vsel %vm266, %v926, 0.0
    %v946 = vadd.f32 %v944, %v945
    %v947 = vsel %vm266, %v931, 0.0
    %v948 = vadd.f32 %v946, %v947
    %v949 = vrot.slane %v948, 4
    %v950 = vadd.f32 %v948, %v949
    %v951 = vrot.slane %v950, 2
    %v952 = vadd.f32 %v950, %v951
    %v953 = vrot.slane %v952, 1
    %v954 = vadd.f32 %v952, %v953
    %v955 = vmul.f32 %v954, %v288
    %v956 = vmul.f32 %v896, %v896
    %v957 = vmul.f32 %v901, %v901
    %v958 = vmul.f32 %v906, %v906
    %v959 = vmul.f32 %v911, %v911
    %v960 = vmul.f32 %v916, %v916
    %v961 = vmul.f32 %v921, %v921
    %v962 = vmul.f32 %v926, %v926
    %v963 = vmul.f32 %v931, %v931
    %v964 = vsel %vm266, %v956, 0.0
    %v965 = vsel %vm266, %v957, 0.0
    %v966 = vadd.f32 %v964, %v965
    %v967 = vsel %vm266, %v958, 0.0
    %v968 = vadd.f32 %v966, %v967
    %v969 = vsel %vm266, %v959, 0.0
    %v970 = vadd.f32 %v968, %v969
    %v971 = vsel %vm266, %v960, 0.0
    %v972 = vadd.f32 %v970, %v971
    %v973 = vsel %vm266, %v961, 0.0
    %v974 = vadd.f32 %v972, %v973
    %v975 = vsel %vm266, %v962, 0.0
    %v976 = vadd.f32 %v974, %v975
    %v977 = vsel %vm266, %v963, 0.0
    %v978 = vadd.f32 %v976, %v977
    %v979 = vrot.slane %v978, 4
    %v980 = vadd.f32 %v978, %v979
    %v981 = vrot.slane %v980, 2
    %v982 = vadd.f32 %v980, %v981
    %v983 = vrot.slane %v982, 1
    %v984 = vadd.f32 %v982, %v983
    %v985 = vmul.f32 %v984, %v288
    %v986 = vmul.f32 %v955, %v955
    %v987 = vsub.f32 %v985, %v986
    %v988 = vmax.f32 %v987, 0.0
    %v989 = vadd.f32 %v988, 1e-05
    %v990 = vrsqrt.pop %v989
    %v991 = vsub.f32 %v896, %v955
    %v992 = vsub.f32 %v901, %v955
    %v993 = vsub.f32 %v906, %v955
    %v994 = vsub.f32 %v911, %v955
    %v995 = vsub.f32 %v916, %v955
    %v996 = vsub.f32 %v921, %v955
    %v997 = vsub.f32 %v926, %v955
    %v998 = vsub.f32 %v931, %v955
    %v999 = vmul.f32 %v991, %v990
    %v1000 = vmul.f32 %v992, %v990
    %v1001 = vmul.f32 %v993, %v990
    %v1002 = vmul.f32 %v994, %v990
    %v1003 = vmul.f32 %v995, %v990
    %v1004 = vmul.f32 %v996, %v990
    %v1005 = vmul.f32 %v997, %v990
    %v1006 = vmul.f32 %v998, %v990
    %v1007 = vmax.f32 %v999, 0.0
    %v1008 = vmax.f32 %v1000, 0.0
    %v1009 = vmax.f32 %v1001, 0.0
    %v1010 = vmax.f32 %v1002, 0.0
    %v1011 = vmax.f32 %v1003, 0.0
    %v1012 = vmax.f32 %v1004, 0.0
    %v1013 = vmax.f32 %v1005, 0.0
    %v1014 = vmax.f32 %v1006, 0.0
    %v1015 = vsel %vm266, %v1007, 0.0
    %v1016 = vsel %vm266, %v1008, 0.0
    %v1017 = vadd.f32 %v1015, %v1016
    %v1018 = vsel %vm266, %v1009, 0.0
    %v1019 = vadd.f32 %v1017, %v1018
    %v1020 = vsel %vm266, %v1010, 0.0
    %v1021 = vadd.f32 %v1019, %v1020
    %v1022 = vrot.slane %v1021, 4
    %v1023 = vadd.f32 %v1021, %v1022
    %v1024 = vrot.slane %v1023, 2
    %v1025 = vadd.f32 %v1023, %v1024
    %v1026 = vrot.slane %v1025, 1
    %v1027 = vadd.f32 %v1025, %v1026
    %v1028 = vsel %vm266, %v1011, 0.0
    %v1029 = vsel %vm266, %v1012, 0.0
    %v1030 = vadd.f32 %v1028, %v1029
    %v1031 = vsel %vm266, %v1013, 0.0
    %v1032 = vadd.f32 %v1030, %v1031
    %v1033 = vsel %vm266, %v1014, 0.0
    %v1034 = vadd.f32 %v1032, %v1033
    %v1035 = vrot.slane %v1034, 4
    %v1036 = vadd.f32 %v1034, %v1035
    %v1037 = vrot.slane %v1036, 2
    %v1038 = vadd.f32 %v1036, %v1037
    %v1039 = vrot.slane %v1038, 1
    %v1040 = vadd.f32 %v1038, %v1039
    %v1041 = vrcp.pop 32.0
    %v1042 = vmul.f32 %v1027, %v1041
    %v1043 = vmul.f32 %v1040, %v1041
    %v1044 = vsub.f32 %v1007, %v1042
    %v1045 = vsub.f32 %v1008, %v1042
    %v1046 = vsub.f32 %v1009, %v1042
    %v1047 = vsub.f32 %v1010, %v1042
    %v1048 = vsub.f32 %v1011, %v1043
    %v1049 = vsub.f32 %v1012, %v1043
    %v1050 = vsub.f32 %v1013, %v1043
    %v1051 = vsub.f32 %v1014, %v1043
    %v1052 = vmul.f32 %v1044, %v1044
    %v1053 = vmul.f32 %v1045, %v1045
    %v1054 = vmul.f32 %v1046, %v1046
    %v1055 = vmul.f32 %v1047, %v1047
    %v1056 = vmul.f32 %v1048, %v1048
    %v1057 = vmul.f32 %v1049, %v1049
    %v1058 = vmul.f32 %v1050, %v1050
    %v1059 = vmul.f32 %v1051, %v1051
    %v1060 = vsel %vm266, %v1052, 0.0
    %v1061 = vsel %vm266, %v1053, 0.0
    %v1062 = vadd.f32 %v1060, %v1061
    %v1063 = vsel %vm266, %v1054, 0.0
    %v1064 = vadd.f32 %v1062, %v1063
    %v1065 = vsel %vm266, %v1055, 0.0
    %v1066 = vadd.f32 %v1064, %v1065
    %v1067 = vrot.slane %v1066, 4
    %v1068 = vadd.f32 %v1066, %v1067
    %v1069 = vrot.slane %v1068, 2
    %v1070 = vadd.f32 %v1068, %v1069
    %v1071 = vrot.slane %v1070, 1
    %v1072 = vadd.f32 %v1070, %v1071
    %v1073 = vsel %vm266, %v1056, 0.0
    %v1074 = vsel %vm266, %v1057, 0.0
    %v1075 = vadd.f32 %v1073, %v1074
    %v1076 = vsel %vm266, %v1058, 0.0
    %v1077 = vadd.f32 %v1075, %v1076
    %v1078 = vsel %vm266, %v1059, 0.0
    %v1079 = vadd.f32 %v1077, %v1078
    %v1080 = vrot.slane %v1079, 4
    %v1081 = vadd.f32 %v1079, %v1080
    %v1082 = vrot.slane %v1081, 2
    %v1083 = vadd.f32 %v1081, %v1082
    %v1084 = vrot.slane %v1083, 1
    %v1085 = vadd.f32 %v1083, %v1084
    %v1086 = vmul.f32 %v1072, 0.032258064
    %v1087 = vmul.f32 %v1085, 0.032258064
    %v1088 = vrsqrt.pop %v1086
    %v1089 = vmul.f32 %v1086, %v1088
    %vm1090 = vcmp.eq.f32.partialorder %v1086, inf
    %v1091 = vsel %vm1090, %v1086, %v1089
    %vm1092 = vcmp.eq.f32.partialorder %v1086, 0.0
    %v1093 = vand.u32 %v1086, 2147483648
    %v1094 = vsel %vm1092, %v1093, %v1091
    %v1095 = vrsqrt.pop %v1087
    %v1096 = vmul.f32 %v1087, %v1095
    %vm1097 = vcmp.eq.f32.partialorder %v1087, inf
    %v1098 = vsel %vm1097, %v1087, %v1096
    %vm1099 = vcmp.eq.f32.partialorder %v1087, 0.0
    %v1100 = vand.u32 %v1087, 2147483648
    %v1101 = vsel %vm1099, %v1100, %v1098
    %v1102 = vld [vmem:[%s1 + $0x110] sm:$0xff]
    %v1103 = vld [vmem:[%s1 + $0x118] sm:$0xff]
    %v1104 = vld [vmem:[%s1 + $0x120] sm:$0xff]
    %v1105 = vld [vmem:[%s1 + $0x128] sm:$0xff]
    %v1106 = vld [vmem:[%s1 + $0x130] sm:$0xff]
    %v1107 = vld [vmem:[%s1 + $0x138] sm:$0xff]
    %v1108 = vld [vmem:[%s1 + $0x140] sm:$0xff]
    %v1109 = vld [vmem:[%s1 + $0x148] sm:$0xff]
    %vm1112 = vcmask 1041409
    %v1113 = vsel %vm1112, %v1101, %v1094
    %v1114 = vsel %vm266, %v1113, 0
    %1116 = vmatprep.subr.mxu0 0.0
    %1117 = vmatpush1.msra.mxu0 %v1106
    %1118 = vmatprep.subr.mxu0 0.0
    %1119 = vmatpush1.msra.mxu0 %v1107
    %1120 = vmatprep.subr.mxu0 0.0
    %1121 = vmatpush1.msra.mxu0 %v1108
    %1122 = vmatprep.subr.mxu0 0.0
    %1123 = vmatpush1.msra.mxu0 %v1109
    %1124 = vmatprep.subr.mxu0 0.0
    %1125 = vmatpush1.msra.mxu0 0.0
    %1126 = vmatprep.subr.mxu0 0.0
    %1127 = vmatpush1.msra.mxu0 0.0
    %1128 = vmatprep.subr.mxu0 0.0
    %1129 = vmatpush1.msra.mxu0 0.0
    %1130 = vmatprep.subr.mxu0 0.0
    %1131 = vmatpush1.msra.mxu0 0.0
    %1132 = vmatprep.subr.mxu0 0.0
    %1133 = vmatpush1.msra.mxu0 0.0
    %1134 = vmatprep.subr.mxu0 0.0
    %1135 = vmatpush1.msra.mxu0 0.0
    %1136 = vmatprep.subr.mxu0 0.0
    %1137 = vmatpush1.msra.mxu0 0.0
    %1138 = vmatprep.subr.mxu0 0.0
    %1139 = vmatpush1.msra.mxu0 0.0
    %1140 = vmatprep.subr.mxu0 0.0
    %1141 = vmatpush1.msra.mxu0 0.0
    %1142 = vmatprep.subr.mxu0 0.0
    %1143 = vmatpush1.msra.mxu0 0.0
    %1144 = vmatprep.subr.mxu0 0.0
    %1145 = vmatpush1.msra.mxu0 0.0
    %1146 = vmatprep.subr.mxu0 0.0
    %1147 = vmatpush1.msra.mxu0 0.0
    %1148 = vmatprep.subr.mxu0 0.0
    %1149 = vmatpush1.msra.mxu0 0.0
    %1150 = vmatprep.subr.mxu0 0.0
    %1151 = vmatpush1.msra.mxu0 0.0
    %1152 = vmatprep.subr.mxu0 0.0
    %1153 = vmatpush1.msra.mxu0 0.0
    %1154 = vmatprep.subr.mxu0 0.0
    %1155 = vmatpush1.msra.mxu0 0.0
    %1156 = vmatprep.subr.mxu0 0.0
    %1157 = vmatpush1.msra.mxu0 0.0
    %1158 = vmatprep.subr.mxu0 0.0
    %1159 = vmatpush1.msra.mxu0 0.0
    %1160 = vmatprep.subr.mxu0 0.0
    %1161 = vmatpush1.msra.mxu0 0.0
    %1162 = vmatprep.subr.mxu0 0.0
    %1163 = vmatpush1.msra.mxu0 0.0
    %1164 = vmatprep.subr.mxu0 0.0
    %1165 = vmatpush1.msra.mxu0 0.0
    %1166 = vmatprep.subr.mxu0 0.0
    %1167 = vmatpush1.msra.mxu0 0.0
    %1168 = vmatprep.subr.mxu0 0.0
    %1169 = vmatpush1.msra.mxu0 0.0
    %1170 = vmatprep.subr.mxu0 0.0
    %1171 = vmatpush1.msra.mxu0 0.0
    %1172 = vmatprep.subr.mxu0 0.0
    %1173 = vmatpush1.msra.mxu0 0.0
    %1174 = vmatprep.subr.mxu0 0.0
    %1175 = vmatpush1.msra.mxu0 0.0
    %1176 = vmatprep.subr.mxu0 0.0
    %1177 = vmatpush1.msra.mxu0 0.0
    %1178 = vmatprep.subr.mxu0 0.0
    %1179 = vmatpush1.msra.mxu0 0.0
    %1180 = vmatprep.mubr.f32.mxu0 0.0
    %1181 = vmatmul.mubr.f32.gmra.mrb[0].mxu0 %v1114
    %v1182 = vpop.f32.mrb[0].mxu0
    %v1183 = vadd.f32 0.0, %v1182
    %v1184 = vpop.f32.mrb[0].mxu0
    %1185 = vdwg.mxu0
    %v1188 = vsel %vm1112, %v1043, %v1042
    %v1189 = vsel %vm266, %v1188, 0
    %1191 = vmatprep.subr.mxu0 0.0
    %1192 = vmatpush1.msra.mxu0 %v1102
    %1193 = vmatprep.subr.mxu0 0.0
    %1194 = vmatpush1.msra.mxu0 %v1103
    %1195 = vmatprep.subr.mxu0 0.0
    %1196 = vmatpush1.msra.mxu0 %v1104
    %1197 = vmatprep.subr.mxu0 0.0
    %1198 = vmatpush1.msra.mxu0 %v1105
    %1199 = vmatprep.subr.mxu0 0.0
    %1200 = vmatpush1.msra.mxu0 0.0
    %1201 = vmatprep.subr.mxu0 0.0
    %1202 = vmatpush1.msra.mxu0 0.0
    %1203 = vmatprep.subr.mxu0 0.0
    %1204 = vmatpush1.msra.mxu0 0.0
    %1205 = vmatprep.subr.mxu0 0.0
    %1206 = vmatpush1.msra.mxu0 0.0
    %1207 = vmatprep.subr.mxu0 0.0
    %1208 = vmatpush1.msra.mxu0 0.0
    %1209 = vmatprep.subr.mxu0 0.0
    %1210 = vmatpush1.msra.mxu0 0.0
    %1211 = vmatprep.subr.mxu0 0.0
    %1212 = vmatpush1.msra.mxu0 0.0
    %1213 = vmatprep.subr.mxu0 0.0
    %1214 = vmatpush1.msra.mxu0 0.0
    %1215 = vmatprep.subr.mxu0 0.0
    %1216 = vmatpush1.msra.mxu0 0.0
    %1217 = vmatprep.subr.mxu0 0.0
    %1218 = vmatpush1.msra.mxu0 0.0
    %1219 = vmatprep.subr.mxu0 0.0
    %1220 = vmatpush1.msra.mxu0 0.0
    %1221 = vmatprep.subr.mxu0 0.0
    %1222 = vmatpush1.msra.mxu0 0.0
    %1223 = vmatprep.subr.mxu0 0.0
    %1224 = vmatpush1.msra.mxu0 0.0
    %1225 = vmatprep.subr.mxu0 0.0
    %1226 = vmatpush1.msra.mxu0 0.0
    %1227 = vmatprep.subr.mxu0 0.0
    %1228 = vmatpush1.msra.mxu0 0.0
    %1229 = vmatprep.subr.mxu0 0.0
    %1230 = vmatpush1.msra.mxu0 0.0
    %1231 = vmatprep.subr.mxu0 0.0
    %1232 = vmatpush1.msra.mxu0 0.0
    %1233 = vmatprep.subr.mxu0 0.0
    %1234 = vmatpush1.msra.mxu0 0.0
    %1235 = vmatprep.subr.mxu0 0.0
    %1236 = vmatpush1.msra.mxu0 0.0
    %1237 = vmatprep.subr.mxu0 0.0
    %1238 = vmatpush1.msra.mxu0 0.0
    %1239 = vmatprep.subr.mxu0 0.0
    %1240 = vmatpush1.msra.mxu0 0.0
    %1241 = vmatprep.subr.mxu0 0.0
    %1242 = vmatpush1.msra.mxu0 0.0
    %1243 = vmatprep.subr.mxu0 0.0
    %1244 = vmatpush1.msra.mxu0 0.0
    %1245 = vmatprep.subr.mxu0 0.0
    %1246 = vmatpush1.msra.mxu0 0.0
    %1247 = vmatprep.subr.mxu0 0.0
    %1248 = vmatpush1.msra.mxu0 0.0
    %1249 = vmatprep.subr.mxu0 0.0
    %1250 = vmatpush1.msra.mxu0 0.0
    %1251 = vmatprep.subr.mxu0 0.0
    %1252 = vmatpush1.msra.mxu0 0.0
    %1253 = vmatprep.subr.mxu0 0.0
    %1254 = vmatpush1.msra.mxu0 0.0
    %1255 = vmatprep.mubr.f32.mxu0 0.0
    %1256 = vmatmul.mubr.f32.gmra.mrb[0].mxu0 %v1189
    %v1257 = vpop.f32.mrb[0].mxu0
    %v1258 = vadd.f32 %v1183, %v1257
    %v1259 = vpop.f32.mrb[0].mxu0
    %1260 = vdwg.mxu0
    %v1261 = vld [vmem:[%s2 + $0x1] sm:$0x1]
    %v1262 = vlaneseq
    %v1263 = vshrl.u32 %v1262, 7
    %v1264 = vsub.s32 0, %v1263
    %v1265 = vrot.slane %v1261, %v1264
    %v1266 = vadd.f32 %v1258, %v1265
    %v1269 = vunpack.c.l.s4 1966171168
    %v1270 = vunpack.c.0.s8 %v1269
    %v1271 = vlaneseq
    %v1272 = vshrl.u32 %v1271, 7
    %v1273 = vsub.s32 %v1270, %v1272
    %v1274 = vrot.slane %v1266, %v1273
    %v1275 = vcombine.high %v1274, %v1274
    %v1277 = vunpack.c.l.s4 1966171168
    %v1278 = vunpack.c.0.s8 %v1277
    %v1279 = vlaneseq
    %v1280 = vshrl.u32 %v1279, 7
    %v1281 = vsub.s32 %v1278, %v1280
    %v1282 = vrot.slane %v1274, %v1281
    %v1284 = vunpack.c.l.s4 1966171168
    %v1285 = vunpack.c.0.s8 %v1284
    %v1286 = vlaneseq
    %v1287 = vshrl.u32 %v1286, 7
    %v1288 = vsub.s32 %v1285, %v1287
    %v1289 = vrot.slane %v1275, %v1288
    %vm1292 = vcmask 122880
    %1293 = vst.msk [vmem:[#allocation3] sm:$0x1] %vm1292, %v1282
    %1294 = vst.msk [vmem:[#allocation3 + $0x1] sm:$0x1] %vm1292, %v1289
    %v1295 = vld [vmem:[%s1 + $0x150] sm:$0xff]
    %v1296 = vld [vmem:[%s1 + $0x158] sm:$0xff]
    %v1297 = vld [vmem:[%s1 + $0x160] sm:$0xff]
    %v1298 = vld [vmem:[%s1 + $0x168] sm:$0xff]
    %v1299 = vld [vmem:[%s2] sm:$0x1]
    %v1300 = vlaneseq
    %v1301 = vshrl.u32 %v1300, 7
    %v1302 = vsub.s32 0, %v1301
    %v1303 = vrot.slane %v1299, %v1302
    %v1305 = vsel %vm266, %v1007, 0
    %v1308 = vsel %vm266, %v1008, 0
    %v1311 = vsel %vm266, %v1009, 0
    %v1314 = vsel %vm266, %v1010, 0
    %v1317 = vsel %vm266, %v1011, 0
    %v1320 = vsel %vm266, %v1012, 0
    %v1323 = vsel %vm266, %v1013, 0
    %v1326 = vsel %vm266, %v1014, 0
    %1328 = vmatprep.subr.mxu0 0.0
    %1329 = vmatpush1.msra.mxu0 %v1295
    %1330 = vmatprep.subr.mxu0 0.0
    %1331 = vmatpush1.msra.mxu0 %v1296
    %1332 = vmatprep.subr.mxu0 0.0
    %1333 = vmatpush1.msra.mxu0 %v1297
    %1334 = vmatprep.subr.mxu0 0.0
    %1335 = vmatpush1.msra.mxu0 %v1298
    %1336 = vmatprep.subr.mxu0 0.0
    %1337 = vmatpush1.msra.mxu0 0.0
    %1338 = vmatprep.subr.mxu0 0.0
    %1339 = vmatpush1.msra.mxu0 0.0
    %1340 = vmatprep.subr.mxu0 0.0
    %1341 = vmatpush1.msra.mxu0 0.0
    %1342 = vmatprep.subr.mxu0 0.0
    %1343 = vmatpush1.msra.mxu0 0.0
    %1344 = vmatprep.subr.mxu0 0.0
    %1345 = vmatpush1.msra.mxu0 0.0
    %1346 = vmatprep.subr.mxu0 0.0
    %1347 = vmatpush1.msra.mxu0 0.0
    %1348 = vmatprep.subr.mxu0 0.0
    %1349 = vmatpush1.msra.mxu0 0.0
    %1350 = vmatprep.subr.mxu0 0.0
    %1351 = vmatpush1.msra.mxu0 0.0
    %1352 = vmatprep.subr.mxu0 0.0
    %1353 = vmatpush1.msra.mxu0 0.0
    %1354 = vmatprep.subr.mxu0 0.0
    %1355 = vmatpush1.msra.mxu0 0.0
    %1356 = vmatprep.subr.mxu0 0.0
    %1357 = vmatpush1.msra.mxu0 0.0
    %1358 = vmatprep.subr.mxu0 0.0
    %1359 = vmatpush1.msra.mxu0 0.0
    %1360 = vmatprep.subr.mxu0 0.0
    %1361 = vmatpush1.msra.mxu0 0.0
    %1362 = vmatprep.subr.mxu0 0.0
    %1363 = vmatpush1.msra.mxu0 0.0
    %1364 = vmatprep.subr.mxu0 0.0
    %1365 = vmatpush1.msra.mxu0 0.0
    %1366 = vmatprep.subr.mxu0 0.0
    %1367 = vmatpush1.msra.mxu0 0.0
    %1368 = vmatprep.subr.mxu0 0.0
    %1369 = vmatpush1.msra.mxu0 0.0
    %1370 = vmatprep.subr.mxu0 0.0
    %1371 = vmatpush1.msra.mxu0 0.0
    %1372 = vmatprep.subr.mxu0 0.0
    %1373 = vmatpush1.msra.mxu0 0.0
    %1374 = vmatprep.subr.mxu0 0.0
    %1375 = vmatpush1.msra.mxu0 0.0
    %1376 = vmatprep.subr.mxu0 0.0
    %1377 = vmatpush1.msra.mxu0 0.0
    %1378 = vmatprep.subr.mxu0 0.0
    %1379 = vmatpush1.msra.mxu0 0.0
    %1380 = vmatprep.subr.mxu0 0.0
    %1381 = vmatpush1.msra.mxu0 0.0
    %1382 = vmatprep.subr.mxu0 0.0
    %1383 = vmatpush1.msra.mxu0 0.0
    %1384 = vmatprep.subr.mxu0 0.0
    %1385 = vmatpush1.msra.mxu0 0.0
    %1386 = vmatprep.subr.mxu0 0.0
    %1387 = vmatpush1.msra.mxu0 0.0
    %1388 = vmatprep.subr.mxu0 0.0
    %1389 = vmatpush1.msra.mxu0 0.0
    %1390 = vmatprep.subr.mxu0 0.0
    %1391 = vmatpush1.msra.mxu0 0.0
    %1392 = vmatprep.mubr.f32.mxu0 0.0
    %1393 = vmatmul.mubr.f32.gmra.mrb[0].mxu0 %v1305
    %v1394 = vpop.f32.mrb[0].mxu0
    %v1395 = vadd.f32 %v1303, %v1394
    %v1396 = vpop.f32.mrb[0].mxu0
    %1397 = vmatprep.mubr.f32.mxu0 0.0
    %1398 = vmatmul.mubr.f32.gmra.mrb[0].mxu0 %v1308
    %v1399 = vpop.f32.mrb[0].mxu0
    %v1400 = vadd.f32 %v1303, %v1399
    %v1401 = vpop.f32.mrb[0].mxu0
    %1402 = vmatprep.mubr.f32.mxu0 0.0
    %1403 = vmatmul.mubr.f32.gmra.mrb[0].mxu0 %v1311
    %v1404 = vpop.f32.mrb[0].mxu0
    %v1405 = vadd.f32 %v1303, %v1404
    %v1406 = vpop.f32.mrb[0].mxu0
    %1407 = vmatprep.mubr.f32.mxu0 0.0
    %1408 = vmatmul.mubr.f32.gmra.mrb[0].mxu0 %v1314
    %v1409 = vpop.f32.mrb[0].mxu0
    %v1410 = vadd.f32 %v1303, %v1409
    %v1411 = vpop.f32.mrb[0].mxu0
    %1412 = vmatprep.mubr.f32.mxu0 0.0
    %1413 = vmatmul.mubr.f32.gmra.mrb[0].mxu0 %v1317
    %v1414 = vpop.f32.mrb[0].mxu0
    %v1415 = vadd.f32 %v1303, %v1414
    %v1416 = vpop.f32.mrb[0].mxu0
    %1417 = vmatprep.mubr.f32.mxu0 0.0
    %1418 = vmatmul.mubr.f32.gmra.mrb[0].mxu0 %v1320
    %v1419 = vpop.f32.mrb[0].mxu0
    %v1420 = vadd.f32 %v1303, %v1419
    %v1421 = vpop.f32.mrb[0].mxu0
    %1422 = vmatprep.mubr.f32.mxu0 0.0
    %1423 = vmatmul.mubr.f32.gmra.mrb[0].mxu0 %v1323
    %v1424 = vpop.f32.mrb[0].mxu0
    %v1425 = vadd.f32 %v1303, %v1424
    %v1426 = vpop.f32.mrb[0].mxu0
    %1427 = vmatprep.mubr.f32.mxu0 0.0
    %1428 = vmatmul.mubr.f32.gmra.mrb[0].mxu0 %v1326
    %v1429 = vpop.f32.mrb[0].mxu0
    %v1430 = vadd.f32 %v1303, %v1429
    %v1431 = vpop.f32.mrb[0].mxu0
    %1432 = vdwg.mxu0
    %vm1433 = vcmask 31744
    %v1434 = vsel %vm1433, %v1395, -inf
    %1435 = vmax.xlane.f32.xlu0 %v1434
    %v1436 = vpop.xlane.xlu0 %1435
    %v1437 = vsel %vm1433, %v1400, -inf
    %1438 = vmax.xlane.f32.xlu0 %v1437
    %v1439 = vpop.xlane.xlu0 %1438
    %v1440 = vsel %vm1433, %v1405, -inf
    %1441 = vmax.xlane.f32.xlu0 %v1440
    %v1442 = vpop.xlane.xlu0 %1441
    %v1443 = vsel %vm1433, %v1410, -inf
    %1444 = vmax.xlane.f32.xlu0 %v1443
    %v1445 = vpop.xlane.xlu0 %1444
    %v1446 = vsel %vm1433, %v1415, -inf
    %1447 = vmax.xlane.f32.xlu0 %v1446
    %v1448 = vpop.xlane.xlu0 %1447
    %v1449 = vsel %vm1433, %v1420, -inf
    %1450 = vmax.xlane.f32.xlu0 %v1449
    %v1451 = vpop.xlane.xlu0 %1450
    %v1452 = vsel %vm1433, %v1425, -inf
    %1453 = vmax.xlane.f32.xlu0 %v1452
    %v1454 = vpop.xlane.xlu0 %1453
    %v1455 = vsel %vm1433, %v1430, -inf
    %1456 = vmax.xlane.f32.xlu0 %v1455
    %v1457 = vpop.xlane.xlu0 %1456
    %v1458 = vsub.f32 %v1395, %v1436
    %v1459 = vsub.f32 %v1400, %v1439
    %v1460 = vsub.f32 %v1405, %v1442
    %v1461 = vsub.f32 %v1410, %v1445
    %v1462 = vsub.f32 %v1415, %v1448
    %v1463 = vsub.f32 %v1420, %v1451
    %v1464 = vsub.f32 %v1425, %v1454
    %v1465 = vsub.f32 %v1430, %v1457
    %v1466 = vmul.f32 %v1458, 1.442695
    %v1467 = vpow.pop %v1466
    %v1468 = vmul.f32 %v1459, 1.442695
    %v1469 = vpow.pop %v1468
    %v1470 = vmul.f32 %v1460, 1.442695
    %v1471 = vpow.pop %v1470
    %v1472 = vmul.f32 %v1461, 1.442695
    %v1473 = vpow.pop %v1472
    %v1474 = vmul.f32 %v1462, 1.442695
    %v1475 = vpow.pop %v1474
    %v1476 = vmul.f32 %v1463, 1.442695
    %v1477 = vpow.pop %v1476
    %v1478 = vmul.f32 %v1464, 1.442695
    %v1479 = vpow.pop %v1478
    %v1480 = vmul.f32 %v1465, 1.442695
    %v1481 = vpow.pop %v1480
    %v1482 = vsel %vm1433, %v1467, 0.0
    %1483 = vadd.xlane.f32.xlu0 %v1482
    %v1484 = vpop.xlane.xlu0 %1483
    %v1485 = vsel %vm1433, %v1469, 0.0
    %1486 = vadd.xlane.f32.xlu0 %v1485
    %v1487 = vpop.xlane.xlu0 %1486
    %v1488 = vsel %vm1433, %v1471, 0.0
    %1489 = vadd.xlane.f32.xlu0 %v1488
    %v1490 = vpop.xlane.xlu0 %1489
    %v1491 = vsel %vm1433, %v1473, 0.0
    %1492 = vadd.xlane.f32.xlu0 %v1491
    %v1493 = vpop.xlane.xlu0 %1492
    %v1494 = vsel %vm1433, %v1475, 0.0
    %1495 = vadd.xlane.f32.xlu0 %v1494
    %v1496 = vpop.xlane.xlu0 %1495
    %v1497 = vsel %vm1433, %v1477, 0.0
    %1498 = vadd.xlane.f32.xlu0 %v1497
    %v1499 = vpop.xlane.xlu0 %1498
    %v1500 = vsel %vm1433, %v1479, 0.0
    %1501 = vadd.xlane.f32.xlu0 %v1500
    %v1502 = vpop.xlane.xlu0 %1501
    %v1503 = vsel %vm1433, %v1481, 0.0
    %1504 = vadd.xlane.f32.xlu0 %v1503
    %v1505 = vpop.xlane.xlu0 %1504
    %v1506 = vrcp.pop %v1484
    %v1507 = vrcp.pop %v1487
    %v1508 = vrcp.pop %v1490
    %v1509 = vrcp.pop %v1493
    %v1510 = vrcp.pop %v1496
    %v1511 = vrcp.pop %v1499
    %v1512 = vrcp.pop %v1502
    %v1513 = vrcp.pop %v1505
    %v1514 = vmul.f32 %v1467, %v1506
    %v1515 = vmul.f32 %v1469, %v1507
    %v1516 = vmul.f32 %v1471, %v1508
    %v1517 = vmul.f32 %v1473, %v1509
    %v1518 = vmul.f32 %v1475, %v1510
    %v1519 = vmul.f32 %v1477, %v1511
    %v1520 = vmul.f32 %v1479, %v1512
    %v1521 = vmul.f32 %v1481, %v1513
    %1522 = vst.msk [vmem:[%s3] sm:$0xff] %vm1433, %v1514
    %1523 = vst.msk [vmem:[%s3 + $0x8] sm:$0xff] %vm1433, %v1515
    %1524 = vst.msk [vmem:[%s3 + $0x10] sm:$0xff] %vm1433, %v1516
    %1525 = vst.msk [vmem:[%s3 + $0x18] sm:$0xff] %vm1433, %v1517
    %1526 = vst.msk [vmem:[%s3 + $0x20] sm:$0xff] %vm1433, %v1518
    %1527 = vst.msk [vmem:[%s3 + $0x28] sm:$0xff] %vm1433, %v1519
    %1528 = vst.msk [vmem:[%s3 + $0x30] sm:$0xff] %vm1433, %v1520
    %1529 = vst.msk [vmem:[%s3 + $0x38] sm:$0xff] %vm1433, %v1521
    // Predicated region
    $region14: #{tcn_sep_forward.1} parent=1 // pred_check
      _
    $region15: #{tcn_sep_forward.1} parent=1 // pred_check_branch
      %1531 = sbr.rel (0) target = $region17
    $region16: #{tcn_sep_forward.1} parent=1 // pred_region
      _
    $region17: #{tcn_sep_forward.1} parent=1 // pred_fallthru
      _
    // Predicated region
    $region18: #{tcn_sep_forward.1} parent=1 // pred_check
      _
    $region19: #{tcn_sep_forward.1} parent=1 // pred_check_branch
      %1533 = sbr.rel (0) target = $region21
    $region20: #{tcn_sep_forward.1} parent=1 // pred_region
      %s1535 = ssub.s32 32, 32
      %1536 = vsyncadd [#allocation4], %s1535
      %s1537 = sshll.u32 [#allocation3], 4
      %s1538 = int_to_ptr.vmem [resolvable:$true] %s1537
      %1543 = dma.vmem_to_hbm [thread:$0]  %s1538, 32, %s4, [#allocation4], 16, 16, 1
    $region21: #{tcn_sep_forward.1} parent=1 // pred_fallthru
      _
    // Predicated region
    $region22: #{tcn_sep_forward.1} parent=1 // pred_check
      _
    $region23: #{tcn_sep_forward.1} parent=1 // pred_check_branch
      %1545 = sbr.rel (0) target = $region25
    $region24: #{tcn_sep_forward.1} parent=1 // pred_region
      _
    $region25: #{tcn_sep_forward.1} parent=1 // pred_fallthru
      _
    // Predicated region
    $region26: #{tcn_sep_forward.1} parent=1 // pred_check
      _
    $region27: #{tcn_sep_forward.1} parent=1 // pred_check_branch
      %1547 = sbr.rel (0) target = $region29
    $region28: #{tcn_sep_forward.1} parent=1 // pred_region
      %1548 = dma.done [#allocation4], 32
    $region29: #{tcn_sep_forward.1} parent=1 // pred_fallthru
      _
    %1549 = vsyncpa [#allocation4], 1

</llo_original>
